<compile_context>
chip_gen: v5e
topology: v5e:2x2
jax: 0.10.0
libtpu: 0.0.40
codegen_flags: <defaults>
</compile_context>

<pallas_src>
import jax
import jax.numpy as jnp
import numpy as np
from jax.experimental import pallas as pl
from jax.experimental.pallas import tpu as pltpu


HIDDEN = 256  # per-head hidden width (PyTorch Critic uses 256)


# ---------------------------------------------------------------------------
# Kernel
# ---------------------------------------------------------------------------
def critic_kernel(sa_ref, w1_ref, w23_ref, b_ref, out_ref):
    # Packed biases (f32):
    #   row 0 = [b1 | b4]           (512)
    #   row 1 = [b2 | b5]           (512)
    #   row 2 = [b3, b6, 0, ...]    (only first 128 lanes used)
    b = b_ref[...]                                  # (3, 512) f32
    b1 = b[0:1, :]                                  # (1, 512)
    b2 = b[1:2, :]                                  # (1, 512)
    b3 = b[2:3, 0:128]                              # (1, 128)

    # ---- layer 1: both heads fused, f32 matmul, f32 bias/ReLU ----
    h = jnp.dot(sa_ref[...], w1_ref[...],
                preferred_element_type=jnp.float32) + b1     # (B, 512)
    h = jnp.maximum(h, 0.0)

    # ---- layer 2: block-diagonal (512, 512) bf16 matmul, f32 accumulate ----
    g = jnp.dot(h.astype(jnp.bfloat16), w23_ref[:, 0:512],
                preferred_element_type=jnp.float32) + b2     # (B, 512)
    g = jnp.maximum(g, 0.0)

    # ---- layer 3: (512, 128) lane-padded bf16 matmul -> dense (B, 128) ----
    q = jnp.dot(g.astype(jnp.bfloat16), w23_ref[:, 512:640],
                preferred_element_type=jnp.float32) + b3     # (B, 128)
    out_ref[...] = q


# ---------------------------------------------------------------------------
# Host-side param construction / packing
# ---------------------------------------------------------------------------
def make_critic_params(key, state_dim, action_dim, hidden=HIDDEN):
    """nn.Linear-style init, weights stored as [in_features, out_features]."""
    d = state_dim + action_dim
    dims = [(d, hidden), (hidden, hidden), (hidden, 1),
            (d, hidden), (hidden, hidden), (hidden, 1)]
    params = []
    for i, (fan_in, fan_out) in enumerate(dims):
        kw, kb = jax.random.split(jax.random.fold_in(key, i))
        bound = 1.0 / np.sqrt(fan_in)
        w = jax.random.uniform(kw, (fan_in, fan_out), jnp.float32, -bound, bound)
        b = jax.random.uniform(kb, (1, fan_out), jnp.float32, -bound, bound)
        params.extend([w, b])
    return params


def pack_params(params, hidden=HIDDEN):
    """Fuse the twin heads into the compact kernel parameterization."""
    (w1, b1, w2, b2, w3, b3, w4, b4, w5, b5, w6, b6) = params
    H = hidden

    # Layer 1: [w1 | w4] -> (D, 2H) f32 (consumed by the fused concat input).
    w1cat = jnp.concatenate([w1, w4], axis=1)                       # (D, 2H)

    # Layer 2: block-diagonal (2H, 2H) so the fused matmul computes both heads.
    w2bd = jnp.zeros((2 * H, 2 * H), jnp.float32)
    w2bd = w2bd.at[:H, :H].set(w2)
    w2bd = w2bd.at[H:, H:].set(w5)

    # Layer 3: (2H, 128) lane-padded; q1 in column 0, q2 in column 1.
    w3pad = jnp.zeros((2 * H, 128), jnp.float32)
    w3pad = w3pad.at[:H, 0:1].set(w3)
    w3pad = w3pad.at[H:, 1:2].set(w6)

    # One bf16 slab holding layer-2 and layer-3 weights: (2H, 2H + 128).
    w23 = jnp.concatenate([w2bd, w3pad], axis=1).astype(jnp.bfloat16)

    # All biases packed into one (3, 2H) f32 array.
    b_all = jnp.zeros((3, 2 * H), jnp.float32)
    b_all = b_all.at[0, :].set(jnp.concatenate([b1, b4], axis=1)[0])
    b_all = b_all.at[1, :].set(jnp.concatenate([b2, b5], axis=1)[0])
    b_all = b_all.at[2, 0:2].set(jnp.concatenate([b3, b6], axis=1)[0])

    return w1cat, w23, b_all


# ---------------------------------------------------------------------------
# Wrapper
# ---------------------------------------------------------------------------
@jax.jit
def critic_forward(state, action, w1cat, w23, b_all):
    # Concat fused by XLA outside the kernel -> one activation DMA.
    sa = jnp.concatenate([state, action], axis=1)
    B = sa.shape[0]
    vmem = pl.BlockSpec(memory_space=pltpu.MemorySpace.VMEM)
    q = pl.pallas_call(
        critic_kernel,
        out_shape=jax.ShapeDtypeStruct((B, 128), jnp.float32),
        in_specs=[vmem] * 4,
        out_specs=vmem,
    )(sa, w1cat, w23, b_all)
    return q[:, 0:1], q[:, 1:2]


# ---------------------------------------------------------------------------
# Pure-JAX reference (mirrors the kernel's bf16 layer-2/3 MXU operands)
# ---------------------------------------------------------------------------
def reference_forward(state, action, params):
    (w1, b1, w2, b2, w3, b3, w4, b4, w5, b5, w6, b6) = params
    sa = jnp.concatenate([state, action], axis=1)

    def head(wA, bA, wB, bB, wC, bC):
        x = jax.nn.relu(sa @ wA + bA)
        x = jax.nn.relu(
            jnp.dot(x.astype(jnp.bfloat16), wB.astype(jnp.bfloat16),
                    preferred_element_type=jnp.float32) + bB)
        v = jnp.dot(x.astype(jnp.bfloat16), wC.astype(jnp.bfloat16),
                    preferred_element_type=jnp.float32) + bC
        return v

    v1 = head(w1, b1, w2, b2, w3, b3)
    v2 = head(w4, b4, w5, b5, w6, b6)
    return v1, v2


if __name__ == "__main__":
    state_dim, action_dim, batch = 17, 6, 64

    key = jax.random.PRNGKey(0)
    k_s, k_a, k_p = jax.random.split(key, 3)
    state = jax.random.normal(k_s, (batch, state_dim), jnp.float32)
    action = jax.random.normal(k_a, (batch, action_dim), jnp.float32)

    params = make_critic_params(k_p, state_dim, action_dim)
    w1cat, w23, b_all = pack_params(params)

    q1, q2 = critic_forward(state, action, w1cat, w23, b_all)
    jax.block_until_ready((q1, q2))

    r1, r2 = reference_forward(state, action, params)
    np.testing.assert_allclose(np.asarray(q1), np.asarray(r1),
                               rtol=1e-2, atol=1e-2)
    np.testing.assert_allclose(np.asarray(q2), np.asarray(r2),
                               rtol=1e-2, atol=1e-2)
    assert q1.shape == (batch, 1) and q2.shape == (batch, 1)

    print("KERNEL_OK")
</pallas_src>

<mosaic_0001>
module attributes {stable_mosaic.version = 11 : i64} {
  func.func @critic_kernel(%arg0: memref<64x23xf32, #tpu.memory_space<vmem>>, %arg1: memref<23x512xf32, #tpu.memory_space<vmem>>, %arg2: memref<512x640xbf16, #tpu.memory_space<vmem>>, %arg3: memref<3x512xf32, #tpu.memory_space<vmem>>, %arg4: memref<64x128xf32, #tpu.memory_space<vmem>>) attributes {dimension_semantics = [], scalar_prefetch = 0 : i64, scratch_operands = 0 : i64, tpu.core_type = #tpu.core_type<tc>} {
    %c0 = arith.constant 0 : index
    %c0_0 = arith.constant 0 : index
    %0 = vector.load %arg3[%c0, %c0_0] : memref<3x512xf32, #tpu.memory_space<vmem>>, vector<3x512xf32>
    %1 = vector.extract_strided_slice %0 {offsets = [0, 0], sizes = [1, 512], strides = [1, 1]} : vector<3x512xf32> to vector<1x512xf32>
    %2 = vector.extract_strided_slice %0 {offsets = [1, 0], sizes = [1, 512], strides = [1, 1]} : vector<3x512xf32> to vector<1x512xf32>
    %3 = vector.extract_strided_slice %0 {offsets = [2, 0], sizes = [1, 128], strides = [1, 1]} : vector<3x512xf32> to vector<1x128xf32>
    %c0_1 = arith.constant 0 : index
    %c0_2 = arith.constant 0 : index
    %4 = vector.load %arg0[%c0_1, %c0_2] : memref<64x23xf32, #tpu.memory_space<vmem>>, vector<64x23xf32>
    %c0_3 = arith.constant 0 : index
    %c0_4 = arith.constant 0 : index
    %5 = vector.load %arg1[%c0_3, %c0_4] : memref<23x512xf32, #tpu.memory_space<vmem>>, vector<23x512xf32>
    %cst = arith.constant dense<0.000000e+00> : vector<64x512xf32>
    %6 = tpu.matmul %4, %5, %cst {dimension_numbers = #tpu.dot_dimension_numbers<[1], [0], [0], [1], [0, 0, 1, 1], [], []>} : vector<64x23xf32>, vector<23x512xf32>, vector<64x512xf32> -> vector<64x512xf32>
    %7 = vector.broadcast %1 : vector<1x512xf32> to vector<64x512xf32>
    %8 = arith.addf %6, %7 : vector<64x512xf32>
    %cst_5 = arith.constant 0.000000e+00 : f32
    %9 = vector.broadcast %cst_5 : f32 to vector<64x512xf32>
    %10 = arith.maximumf %8, %9 : vector<64x512xf32>
    %11 = arith.truncf %10 : vector<64x512xf32> to vector<64x512xbf16>
    %c0_6 = arith.constant 0 : index
    %c0_7 = arith.constant 0 : index
    %12 = vector.load %arg2[%c0_6, %c0_7] : memref<512x640xbf16, #tpu.memory_space<vmem>>, vector<512x512xbf16>
    %cst_8 = arith.constant dense<0.000000e+00> : vector<64x512xf32>
    %13 = tpu.matmul %11, %12, %cst_8 {dimension_numbers = #tpu.dot_dimension_numbers<[1], [0], [0], [1], [0, 0, 1, 1], [], []>} : vector<64x512xbf16>, vector<512x512xbf16>, vector<64x512xf32> -> vector<64x512xf32>
    %14 = vector.broadcast %2 : vector<1x512xf32> to vector<64x512xf32>
    %15 = arith.addf %13, %14 : vector<64x512xf32>
    %cst_9 = arith.constant 0.000000e+00 : f32
    %16 = vector.broadcast %cst_9 : f32 to vector<64x512xf32>
    %17 = arith.maximumf %15, %16 : vector<64x512xf32>
    %18 = arith.truncf %17 : vector<64x512xf32> to vector<64x512xbf16>
    %c0_10 = arith.constant 0 : index
    %c512 = arith.constant 512 : index
    %19 = vector.load %arg2[%c0_10, %c512] : memref<512x640xbf16, #tpu.memory_space<vmem>>, vector<512x128xbf16>
    %cst_11 = arith.constant dense<0.000000e+00> : vector<64x128xf32>
    %20 = tpu.matmul %18, %19, %cst_11 {dimension_numbers = #tpu.dot_dimension_numbers<[1], [0], [0], [1], [0, 0, 1, 1], [], []>} : vector<64x512xbf16>, vector<512x128xbf16>, vector<64x128xf32> -> vector<64x128xf32>
    %21 = vector.broadcast %3 : vector<1x128xf32> to vector<64x128xf32>
    %22 = arith.addf %20, %21 : vector<64x128xf32>
    %c0_12 = arith.constant 0 : index
    %c0_13 = arith.constant 0 : index
    %23 = vector.load %arg4[%c0_12, %c0_13] : memref<64x128xf32, #tpu.memory_space<vmem>>, vector<64x128xf32>
    tpu.vector_store %arg4[%c0_12, %c0_13], %22 {strides = array<i32>} : memref<64x128xf32, #tpu.memory_space<vmem>>, vector<64x128xf32>,
    return
  }
}

</mosaic_0001>

<llo_original>
// kernel: critic_forward.1
$region0: #{critic_forward.1}
  #allocation0 [shape = 'u32[]', space=smem, size = 0x4, offset = 0x4, fixed_abs, tag = 'smem constant byte address 0x4 - core index']
  #allocation1 [shape = 'u32[72,128]{1,0:T(1,128)}', space=vmem, size = 0x9000, scoped, tag = 'internal scratch']
  %s0 = inlined_call_operand.vmem [shape: f32[64,23], index: 0, kind: input, shape index: {}]
  %s1 = inlined_call_operand.vmem [shape: f32[23,512], index: 1, kind: input, shape index: {}]
  %s2 = inlined_call_operand.hbm [shape: bf16[512,640], index: 2, kind: input, shape index: {}]
  %s3 = inlined_call_operand.vmem [shape: f32[3,512], index: 3, kind: input, shape index: {}]
  %s4 = inlined_call_operand.vmem [shape: f32[64,128], index: 4, kind: output, shape index: {}]
  %s5 = sld [smem:[#allocation0]]
  $region30: #{critic_forward.1} parent=0
    _
  %s7 = ssub.s32 1, %s5
  %s8 = scalar_select 0, %s7, %s5
  $region1: #{critic_forward.1} parent=0
    #allocation2 [shape = 'u8[655360]{0}', space=vmem, size = 0xa0000, scoped, tag = 'input window, operand 2, single buffered']
    #allocation3 [shape = 's32[1]{0}', space=sflag, size = 0x4, scoped, tag = 'scoped memory for critic_forward.1']
    %9 = vsyncpa [#allocation3], 0
    // Predicated region
    $region2: #{critic_forward.1} parent=1 // pred_check
      _
    $region3: #{critic_forward.1} parent=1 // pred_check_branch
      %11 = sbr.rel (0) target = $region5
    $region4: #{critic_forward.1} parent=1 // pred_region
      _
    $region5: #{critic_forward.1} parent=1 // pred_fallthru
      _
    // Predicated region
    $region6: #{critic_forward.1} parent=1 // pred_check
      _
    $region7: #{critic_forward.1} parent=1 // pred_check_branch
      %13 = sbr.rel (0) target = $region9
    $region8: #{critic_forward.1} parent=1 // pred_region
      _
    $region9: #{critic_forward.1} parent=1 // pred_fallthru
      _
    // Predicated region
    $region10: #{critic_forward.1} parent=1 // pred_check
      _
    $region11: #{critic_forward.1} parent=1 // pred_check_branch
      %15 = sbr.rel (0) target = $region13
    $region12: #{critic_forward.1} parent=1 // pred_region
      %17 = vsyncadd [#allocation3], 0
      %s18 = sshll.u32 %s2, 4
      %s19 = int_to_ptr.hbm [resolvable:$true] %s18
      %s20 = sshll.u32 [#allocation2], 4
      %s21 = int_to_ptr.vmem [resolvable:$true] %s20
      %26 = dma.hbm_to_vmem [thread:$0]  %s19, 20480, %s21, [#allocation3], 320, 320, 20
    $region13: #{critic_forward.1} parent=1 // pred_fallthru
      _
    // Predicated region
    $region14: #{critic_forward.1} parent=1 // pred_check
      _
    $region15: #{critic_forward.1} parent=1 // pred_check_branch
      %28 = sbr.rel (0) target = $region17
    $region16: #{critic_forward.1} parent=1 // pred_region
      _
    $region17: #{critic_forward.1} parent=1 // pred_fallthru
      _
    // Predicated region
    $region18: #{critic_forward.1} parent=1 // pred_check
      _
    $region19: #{critic_forward.1} parent=1 // pred_check_branch
      %30 = sbr.rel (0) target = $region21
    $region20: #{critic_forward.1} parent=1 // pred_region
      %32 = dma.done [#allocation3], 20480
    $region21: #{critic_forward.1} parent=1 // pred_fallthru
      _
    %v33 = vld [vmem:[%s3] sm:$0x77]
    %v34 = vld [vmem:[%s3 + $0x8] sm:$0x77]
    %v35 = vld [vmem:[%s0] sm:$0xff]
    %v36 = vld [vmem:[%s0 + $0x8] sm:$0xff]
    %v37 = vld [vmem:[%s0 + $0x10] sm:$0xff]
    %v38 = vld [vmem:[%s0 + $0x18] sm:$0xff]
    %v39 = vld [vmem:[%s0 + $0x20] sm:$0xff]
    %v40 = vld [vmem:[%s0 + $0x28] sm:$0xff]
    %v41 = vld [vmem:[%s0 + $0x30] sm:$0xff]
    %v42 = vld [vmem:[%s0 + $0x38] sm:$0xff]
    %v43 = vld [vmem:[%s1] sm:$0xff]
    %v44 = vld [vmem:[%s1 + $0x8] sm:$0xff]
    %v45 = vld [vmem:[%s1 + $0x10] sm:$0xff]
    %v46 = vld [vmem:[%s1 + $0x18] sm:$0xff]
    %v47 = vld [vmem:[%s1 + $0x20] sm:$0xff]
    %v48 = vld [vmem:[%s1 + $0x28] sm:$0xff]
    %v49 = vld [vmem:[%s1 + $0x30] sm:$0xff]
    %v50 = vld [vmem:[%s1 + $0x38] sm:$0xff]
    %v51 = vld [vmem:[%s1 + $0x40] sm:$0x7f]
    %v52 = vld [vmem:[%s1 + $0x48] sm:$0x7f]
    %v53 = vld [vmem:[%s1 + $0x50] sm:$0x7f]
    %v54 = vld [vmem:[%s1 + $0x58] sm:$0x7f]
    %v57 = vperm.slane %v33, 0
    %v58 = vperm.slane %v33, 4
    %v59 = vperm.slane %v34, 0
    %v60 = vperm.slane %v34, 4
    %v65 = vperm.slane %v57, 0
    %v66 = vperm.slane %v58, 0
    %v67 = vperm.slane %v59, 0
    %v68 = vperm.slane %v60, 0
    %vm69 = vcmask 187392
    %v71 = vsel %vm69, %v35, 0
    %v74 = vsel %vm69, %v36, 0
    %v77 = vsel %vm69, %v37, 0
    %v80 = vsel %vm69, %v38, 0
    %v83 = vsel %vm69, %v39, 0
    %v86 = vsel %vm69, %v40, 0
    %v89 = vsel %vm69, %v41, 0
    %v92 = vsel %vm69, %v42, 0
    %vm94 = vcmask 1046528
    %v96 = vsel %vm94, %v51, 0
    %v99 = vsel %vm94, %v52, 0
    %v102 = vsel %vm94, %v53, 0
    %v105 = vsel %vm94, %v54, 0
    %107 = vmatpush.msra.mxu0 0.0
    %108 = vmatpush.msra.mxu0 0.0
    %109 = vmatpush.msra.mxu0 0.0
    %110 = vmatpush.msra.mxu0 0.0
    %111 = vmatpush.msra.mxu0 0.0
    %112 = vmatpush.msra.mxu0 0.0
    %113 = vmatpush.msra.mxu0 0.0
    %114 = vmatpush.msra.mxu0 0.0
    %115 = vmatpush.msra.mxu0 0.0
    %116 = vmatpush.msra.mxu0 0.0
    %117 = vmatpush.msra.mxu0 0.0
    %118 = vmatpush.msra.mxu0 0.0
    %119 = vmatpush.msra.mxu0 0.0
    %120 = vmatpush.msra.mxu0 %v96
    %121 = vmatpush.msra.mxu0 %v47
    %122 = vmatpush.msra.mxu0 %v43
    %123 = vmatmul.f32.gmra.mxu0 %v71
    %v124 = vpop.f32.mrf.mxu0
    %v125 = vadd.f32 %v65, %v124
    %126 = vmatmul.f32.gmra.mxu0 %v74
    %v127 = vpop.f32.mrf.mxu0
    %v128 = vadd.f32 %v65, %v127
    %129 = vmatmul.f32.gmra.mxu0 %v77
    %v130 = vpop.f32.mrf.mxu0
    %v131 = vadd.f32 %v65, %v130
    %132 = vmatmul.f32.gmra.mxu0 %v80
    %v133 = vpop.f32.mrf.mxu0
    %v134 = vadd.f32 %v65, %v133
    %135 = vmatmul.f32.gmra.mxu0 %v83
    %v136 = vpop.f32.mrf.mxu0
    %v137 = vadd.f32 %v65, %v136
    %138 = vmatmul.f32.gmra.mxu0 %v86
    %v139 = vpop.f32.mrf.mxu0
    %v140 = vadd.f32 %v65, %v139
    %141 = vmatmul.f32.gmra.mxu0 %v89
    %v142 = vpop.f32.mrf.mxu0
    %v143 = vadd.f32 %v65, %v142
    %144 = vmatmul.f32.gmra.mxu0 %v92
    %v145 = vpop.f32.mrf.mxu0
    %v146 = vadd.f32 %v65, %v145
    %147 = vdwg.mxu0
    %148 = vmatpush.msra.mxu0 0.0
    %149 = vmatpush.msra.mxu0 0.0
    %150 = vmatpush.msra.mxu0 0.0
    %151 = vmatpush.msra.mxu0 0.0
    %152 = vmatpush.msra.mxu0 0.0
    %153 = vmatpush.msra.mxu0 0.0
    %154 = vmatpush.msra.mxu0 0.0
    %155 = vmatpush.msra.mxu0 0.0
    %156 = vmatpush.msra.mxu0 0.0
    %157 = vmatpush.msra.mxu0 0.0
    %158 = vmatpush.msra.mxu0 0.0
    %159 = vmatpush.msra.mxu0 0.0
    %160 = vmatpush.msra.mxu0 0.0
    %161 = vmatpush.msra.mxu0 %v99
    %162 = vmatpush.msra.mxu0 %v48
    %163 = vmatpush.msra.mxu0 %v44
    %164 = vmatmul.f32.gmra.mxu0 %v71
    %v165 = vpop.f32.mrf.mxu0
    %v166 = vadd.f32 %v66, %v165
    %167 = vmatmul.f32.gmra.mxu0 %v74
    %v168 = vpop.f32.mrf.mxu0
    %v169 = vadd.f32 %v66, %v168
    %170 = vmatmul.f32.gmra.mxu0 %v77
    %v171 = vpop.f32.mrf.mxu0
    %v172 = vadd.f32 %v66, %v171
    %173 = vmatmul.f32.gmra.mxu0 %v80
    %v174 = vpop.f32.mrf.mxu0
    %v175 = vadd.f32 %v66, %v174
    %176 = vmatmul.f32.gmra.mxu0 %v83
    %v177 = vpop.f32.mrf.mxu0
    %v178 = vadd.f32 %v66, %v177
    %179 = vmatmul.f32.gmra.mxu0 %v86
    %v180 = vpop.f32.mrf.mxu0
    %v181 = vadd.f32 %v66, %v180
    %182 = vmatmul.f32.gmra.mxu0 %v89
    %v183 = vpop.f32.mrf.mxu0
    %v184 = vadd.f32 %v66, %v183
    %185 = vmatmul.f32.gmra.mxu0 %v92
    %v186 = vpop.f32.mrf.mxu0
    %v187 = vadd.f32 %v66, %v186
    %188 = vdwg.mxu0
    %189 = vmatpush.msra.mxu0 0.0
    %190 = vmatpush.msra.mxu0 0.0
    %191 = vmatpush.msra.mxu0 0.0
    %192 = vmatpush.msra.mxu0 0.0
    %193 = vmatpush.msra.mxu0 0.0
    %194 = vmatpush.msra.mxu0 0.0
    %195 = vmatpush.msra.mxu0 0.0
    %196 = vmatpush.msra.mxu0 0.0
    %197 = vmatpush.msra.mxu0 0.0
    %198 = vmatpush.msra.mxu0 0.0
    %199 = vmatpush.msra.mxu0 0.0
    %200 = vmatpush.msra.mxu0 0.0
    %201 = vmatpush.msra.mxu0 0.0
    %202 = vmatpush.msra.mxu0 %v102
    %203 = vmatpush.msra.mxu0 %v49
    %204 = vmatpush.msra.mxu0 %v45
    %205 = vmatmul.f32.gmra.mxu0 %v71
    %v206 = vpop.f32.mrf.mxu0
    %v207 = vadd.f32 %v67, %v206
    %208 = vmatmul.f32.gmra.mxu0 %v74
    %v209 = vpop.f32.mrf.mxu0
    %v210 = vadd.f32 %v67, %v209
    %211 = vmatmul.f32.gmra.mxu0 %v77
    %v212 = vpop.f32.mrf.mxu0
    %v213 = vadd.f32 %v67, %v212
    %214 = vmatmul.f32.gmra.mxu0 %v80
    %v215 = vpop.f32.mrf.mxu0
    %v216 = vadd.f32 %v67, %v215
    %217 = vmatmul.f32.gmra.mxu0 %v83
    %v218 = vpop.f32.mrf.mxu0
    %v219 = vadd.f32 %v67, %v218
    %220 = vmatmul.f32.gmra.mxu0 %v86
    %v221 = vpop.f32.mrf.mxu0
    %v222 = vadd.f32 %v67, %v221
    %223 = vmatmul.f32.gmra.mxu0 %v89
    %v224 = vpop.f32.mrf.mxu0
    %v225 = vadd.f32 %v67, %v224
    %226 = vmatmul.f32.gmra.mxu0 %v92
    %v227 = vpop.f32.mrf.mxu0
    %v228 = vadd.f32 %v67, %v227
    %229 = vdwg.mxu0
    %230 = vmatpush.msra.mxu0 0.0
    %231 = vmatpush.msra.mxu0 0.0
    %232 = vmatpush.msra.mxu0 0.0
    %233 = vmatpush.msra.mxu0 0.0
    %234 = vmatpush.msra.mxu0 0.0
    %235 = vmatpush.msra.mxu0 0.0
    %236 = vmatpush.msra.mxu0 0.0
    %237 = vmatpush.msra.mxu0 0.0
    %238 = vmatpush.msra.mxu0 0.0
    %239 = vmatpush.msra.mxu0 0.0
    %240 = vmatpush.msra.mxu0 0.0
    %241 = vmatpush.msra.mxu0 0.0
    %242 = vmatpush.msra.mxu0 0.0
    %243 = vmatpush.msra.mxu0 %v105
    %244 = vmatpush.msra.mxu0 %v50
    %245 = vmatpush.msra.mxu0 %v46
    %246 = vmatmul.f32.gmra.mxu0 %v71
    %v247 = vpop.f32.mrf.mxu0
    %v248 = vadd.f32 %v68, %v247
    %249 = vmatmul.f32.gmra.mxu0 %v74
    %v250 = vpop.f32.mrf.mxu0
    %v251 = vadd.f32 %v68, %v250
    %252 = vmatmul.f32.gmra.mxu0 %v77
    %v253 = vpop.f32.mrf.mxu0
    %v254 = vadd.f32 %v68, %v253
    %255 = vmatmul.f32.gmra.mxu0 %v80
    %v256 = vpop.f32.mrf.mxu0
    %v257 = vadd.f32 %v68, %v256
    %258 = vmatmul.f32.gmra.mxu0 %v83
    %v259 = vpop.f32.mrf.mxu0
    %v260 = vadd.f32 %v68, %v259
    %261 = vmatmul.f32.gmra.mxu0 %v86
    %v262 = vpop.f32.mrf.mxu0
    %v263 = vadd.f32 %v68, %v262
    %264 = vmatmul.f32.gmra.mxu0 %v89
    %v265 = vpop.f32.mrf.mxu0
    %v266 = vadd.f32 %v68, %v265
    %267 = vmatmul.f32.gmra.mxu0 %v92
    %v268 = vpop.f32.mrf.mxu0
    %v269 = vadd.f32 %v68, %v268
    %270 = vdwg.mxu0
    %v271 = vmax.f32 %v125, 0.0
    %v272 = vmax.f32 %v166, 0.0
    %v273 = vmax.f32 %v207, 0.0
    %v274 = vmax.f32 %v248, 0.0
    %v275 = vmax.f32 %v128, 0.0
    %v276 = vmax.f32 %v169, 0.0
    %v277 = vmax.f32 %v210, 0.0
    %v278 = vmax.f32 %v251, 0.0
    %v279 = vmax.f32 %v131, 0.0
    %v280 = vmax.f32 %v172, 0.0
    %v281 = vmax.f32 %v213, 0.0
    %v282 = vmax.f32 %v254, 0.0
    %v283 = vmax.f32 %v134, 0.0
    %v284 = vmax.f32 %v175, 0.0
    %v285 = vmax.f32 %v216, 0.0
    %v286 = vmax.f32 %v257, 0.0
    %v287 = vmax.f32 %v137, 0.0
    %v288 = vmax.f32 %v178, 0.0
    %v289 = vmax.f32 %v219, 0.0
    %v290 = vmax.f32 %v260, 0.0
    %v291 = vmax.f32 %v140, 0.0
    %v292 = vmax.f32 %v181, 0.0
    %v293 = vmax.f32 %v222, 0.0
    %v294 = vmax.f32 %v263, 0.0
    %v295 = vmax.f32 %v143, 0.0
    %v296 = vmax.f32 %v184, 0.0
    %v297 = vmax.f32 %v225, 0.0
    %v298 = vmax.f32 %v266, 0.0
    %v299 = vmax.f32 %v146, 0.0
    %v300 = vmax.f32 %v187, 0.0
    %v301 = vmax.f32 %v228, 0.0
    %v302 = vmax.f32 %v269, 0.0
    %v303 = vpack.c.bf16 %v275, %v271
    %v304 = vpack.c.bf16 %v276, %v272
    %v305 = vpack.c.bf16 %v277, %v273
    %v306 = vpack.c.bf16 %v278, %v274
    %v307 = vpack.c.bf16 %v283, %v279
    %v308 = vpack.c.bf16 %v284, %v280
    %v309 = vpack.c.bf16 %v285, %v281
    %v310 = vpack.c.bf16 %v286, %v282
    %v311 = vpack.c.bf16 %v291, %v287
    %v312 = vpack.c.bf16 %v292, %v288
    %v313 = vpack.c.bf16 %v293, %v289
    %v314 = vpack.c.bf16 %v294, %v290
    %v315 = vpack.c.bf16 %v299, %v295
    %v316 = vpack.c.bf16 %v300, %v296
    %v317 = vpack.c.bf16 %v301, %v297
    %v318 = vpack.c.bf16 %v302, %v298
    %v319 = vld [vmem:[#allocation2] sm:$0xff]
    %v320 = vld [vmem:[#allocation2 + $0x8] sm:$0xff]
    %v321 = vld [vmem:[#allocation2 + $0x14] sm:$0xff]
    %v322 = vld [vmem:[#allocation2 + $0x1c] sm:$0xff]
    %v323 = vld [vmem:[#allocation2 + $0x28] sm:$0xff]
    %v324 = vld [vmem:[#allocation2 + $0x30] sm:$0xff]
    %v325 = vld [vmem:[#allocation2 + $0x3c] sm:$0xff]
    %v326 = vld [vmem:[#allocation2 + $0x44] sm:$0xff]
    %v327 = vld [vmem:[#allocation2 + $0x50] sm:$0xff]
    %v328 = vld [vmem:[#allocation2 + $0x58] sm:$0xff]
    %v329 = vld [vmem:[#allocation2 + $0x64] sm:$0xff]
    %v330 = vld [vmem:[#allocation2 + $0x6c] sm:$0xff]
    %v331 = vld [vmem:[#allocation2 + $0x78] sm:$0xff]
    %v332 = vld [vmem:[#allocation2 + $0x80] sm:$0xff]
    %v333 = vld [vmem:[#allocation2 + $0x8c] sm:$0xff]
    %v334 = vld [vmem:[#allocation2 + $0x94] sm:$0xff]
    %v335 = vld [vmem:[#allocation2 + $0xa0] sm:$0xff]
    %v336 = vld [vmem:[#allocation2 + $0xa8] sm:$0xff]
    %v337 = vld [vmem:[#allocation2 + $0xb4] sm:$0xff]
    %v338 = vld [vmem:[#allocation2 + $0xbc] sm:$0xff]
    %v339 = vld [vmem:[#allocation2 + $0xc8] sm:$0xff]
    %v340 = vld [vmem:[#allocation2 + $0xd0] sm:$0xff]
    %v341 = vld [vmem:[#allocation2 + $0xdc] sm:$0xff]
    %v342 = vld [vmem:[#allocation2 + $0xe4] sm:$0xff]
    %v343 = vld [vmem:[#allocation2 + $0xf0] sm:$0xff]
    %v344 = vld [vmem:[#allocation2 + $0xf8] sm:$0xff]
    %v345 = vld [vmem:[#allocation2 + $0x104] sm:$0xff]
    %v346 = vld [vmem:[#allocation2 + $0x10c] sm:$0xff]
    %v347 = vld [vmem:[#allocation2 + $0x118] sm:$0xff]
    %v348 = vld [vmem:[#allocation2 + $0x120] sm:$0xff]
    %v349 = vld [vmem:[#allocation2 + $0x12c] sm:$0xff]
    %v350 = vld [vmem:[#allocation2 + $0x134] sm:$0xff]
    %v351 = vld [vmem:[#allocation2 + $0x140] sm:$0xff]
    %v352 = vld [vmem:[#allocation2 + $0x148] sm:$0xff]
    %v353 = vld [vmem:[#allocation2 + $0x154] sm:$0xff]
    %v354 = vld [vmem:[#allocation2 + $0x15c] sm:$0xff]
    %v355 = vld [vmem:[#allocation2 + $0x168] sm:$0xff]
    %v356 = vld [vmem:[#allocation2 + $0x170] sm:$0xff]
    %v357 = vld [vmem:[#allocation2 + $0x17c] sm:$0xff]
    %v358 = vld [vmem:[#allocation2 + $0x184] sm:$0xff]
    %v359 = vld [vmem:[#allocation2 + $0x190] sm:$0xff]
    %v360 = vld [vmem:[#allocation2 + $0x198] sm:$0xff]
    %v361 = vld [vmem:[#allocation2 + $0x1a4] sm:$0xff]
    %v362 = vld [vmem:[#allocation2 + $0x1ac] sm:$0xff]
    %v363 = vld [vmem:[#allocation2 + $0x1b8] sm:$0xff]
    %v364 = vld [vmem:[#allocation2 + $0x1c0] sm:$0xff]
    %v365 = vld [vmem:[#allocation2 + $0x1cc] sm:$0xff]
    %v366 = vld [vmem:[#allocation2 + $0x1d4] sm:$0xff]
    %v367 = vld [vmem:[#allocation2 + $0x1e0] sm:$0xff]
    %v368 = vld [vmem:[#allocation2 + $0x1e8] sm:$0xff]
    %v369 = vld [vmem:[#allocation2 + $0x1f4] sm:$0xff]
    %v370 = vld [vmem:[#allocation2 + $0x1fc] sm:$0xff]
    %v371 = vld [vmem:[#allocation2 + $0x208] sm:$0xff]
    %v372 = vld [vmem:[#allocation2 + $0x210] sm:$0xff]
    %v373 = vld [vmem:[#allocation2 + $0x21c] sm:$0xff]
    %v374 = vld [vmem:[#allocation2 + $0x224] sm:$0xff]
    %v375 = vld [vmem:[#allocation2 + $0x230] sm:$0xff]
    %v376 = vld [vmem:[#allocation2 + $0x238] sm:$0xff]
    %v377 = vld [vmem:[#allocation2 + $0x244] sm:$0xff]
    %v378 = vld [vmem:[#allocation2 + $0x24c] sm:$0xff]
    %v379 = vld [vmem:[#allocation2 + $0x258] sm:$0xff]
    %v380 = vld [vmem:[#allocation2 + $0x260] sm:$0xff]
    %v381 = vld [vmem:[#allocation2 + $0x26c] sm:$0xff]
    %v382 = vld [vmem:[#allocation2 + $0x274] sm:$0xff]
    %v383 = vld [vmem:[#allocation2 + $0x280] sm:$0xff]
    %v384 = vld [vmem:[#allocation2 + $0x288] sm:$0xff]
    %v385 = vld [vmem:[#allocation2 + $0x294] sm:$0xff]
    %v386 = vld [vmem:[#allocation2 + $0x29c] sm:$0xff]
    %v387 = vld [vmem:[#allocation2 + $0x2a8] sm:$0xff]
    %v388 = vld [vmem:[#allocation2 + $0x2b0] sm:$0xff]
    %v389 = vld [vmem:[#allocation2 + $0x2bc] sm:$0xff]
    %v390 = vld [vmem:[#allocation2 + $0x2c4] sm:$0xff]
    %v391 = vld [vmem:[#allocation2 + $0x2d0] sm:$0xff]
    %v392 = vld [vmem:[#allocation2 + $0x2d8] sm:$0xff]
    %v393 = vld [vmem:[#allocation2 + $0x2e4] sm:$0xff]
    %v394 = vld [vmem:[#allocation2 + $0x2ec] sm:$0xff]
    %v395 = vld [vmem:[#allocation2 + $0x2f8] sm:$0xff]
    %v396 = vld [vmem:[#allocation2 + $0x300] sm:$0xff]
    %v397 = vld [vmem:[#allocation2 + $0x30c] sm:$0xff]
    %v398 = vld [vmem:[#allocation2 + $0x314] sm:$0xff]
    %v399 = vld [vmem:[#allocation2 + $0x320] sm:$0xff]
    %v400 = vld [vmem:[#allocation2 + $0x328] sm:$0xff]
    %v401 = vld [vmem:[#allocation2 + $0x334] sm:$0xff]
    %v402 = vld [vmem:[#allocation2 + $0x33c] sm:$0xff]
    %v403 = vld [vmem:[#allocation2 + $0x348] sm:$0xff]
    %v404 = vld [vmem:[#allocation2 + $0x350] sm:$0xff]
    %v405 = vld [vmem:[#allocation2 + $0x35c] sm:$0xff]
    %v406 = vld [vmem:[#allocation2 + $0x364] sm:$0xff]
    %v407 = vld [vmem:[#allocation2 + $0x370] sm:$0xff]
    %v408 = vld [vmem:[#allocation2 + $0x378] sm:$0xff]
    %v409 = vld [vmem:[#allocation2 + $0x384] sm:$0xff]
    %v410 = vld [vmem:[#allocation2 + $0x38c] sm:$0xff]
    %v411 = vld [vmem:[#allocation2 + $0x398] sm:$0xff]
    %v412 = vld [vmem:[#allocation2 + $0x3a0] sm:$0xff]
    %v413 = vld [vmem:[#allocation2 + $0x3ac] sm:$0xff]
    %v414 = vld [vmem:[#allocation2 + $0x3b4] sm:$0xff]
    %v415 = vld [vmem:[#allocation2 + $0x3c0] sm:$0xff]
    %v416 = vld [vmem:[#allocation2 + $0x3c8] sm:$0xff]
    %v417 = vld [vmem:[#allocation2 + $0x3d4] sm:$0xff]
    %v418 = vld [vmem:[#allocation2 + $0x3dc] sm:$0xff]
    %v419 = vld [vmem:[#allocation2 + $0x3e8] sm:$0xff]
    %v420 = vld [vmem:[#allocation2 + $0x3f0] sm:$0xff]
    %v421 = vld [vmem:[#allocation2 + $0x3fc] sm:$0xff]
    %v422 = vld [vmem:[#allocation2 + $0x404] sm:$0xff]
    %v423 = vld [vmem:[#allocation2 + $0x410] sm:$0xff]
    %v424 = vld [vmem:[#allocation2 + $0x418] sm:$0xff]
    %v425 = vld [vmem:[#allocation2 + $0x424] sm:$0xff]
    %v426 = vld [vmem:[#allocation2 + $0x42c] sm:$0xff]
    %v427 = vld [vmem:[#allocation2 + $0x438] sm:$0xff]
    %v428 = vld [vmem:[#allocation2 + $0x440] sm:$0xff]
    %v429 = vld [vmem:[#allocation2 + $0x44c] sm:$0xff]
    %v430 = vld [vmem:[#allocation2 + $0x454] sm:$0xff]
    %v431 = vld [vmem:[#allocation2 + $0x460] sm:$0xff]
    %v432 = vld [vmem:[#allocation2 + $0x468] sm:$0xff]
    %v433 = vld [vmem:[#allocation2 + $0x474] sm:$0xff]
    %v434 = vld [vmem:[#allocation2 + $0x47c] sm:$0xff]
    %v435 = vld [vmem:[#allocation2 + $0x488] sm:$0xff]
    %v436 = vld [vmem:[#allocation2 + $0x490] sm:$0xff]
    %v437 = vld [vmem:[#allocation2 + $0x49c] sm:$0xff]
    %v438 = vld [vmem:[#allocation2 + $0x4a4] sm:$0xff]
    %v439 = vld [vmem:[#allocation2 + $0x4b0] sm:$0xff]
    %v440 = vld [vmem:[#allocation2 + $0x4b8] sm:$0xff]
    %v441 = vld [vmem:[#allocation2 + $0x4c4] sm:$0xff]
    %v442 = vld [vmem:[#allocation2 + $0x4cc] sm:$0xff]
    %v443 = vld [vmem:[#allocation2 + $0x4d8] sm:$0xff]
    %v444 = vld [vmem:[#allocation2 + $0x4e0] sm:$0xff]
    %v445 = vld [vmem:[#allocation2 + $0x4ec] sm:$0xff]
    %v446 = vld [vmem:[#allocation2 + $0x4f4] sm:$0xff]
    %v447 = vperm.slane %v33, 1
    %v448 = vperm.slane %v33, 5
    %v449 = vperm.slane %v34, 1
    %v450 = vperm.slane %v34, 5
    %v455 = vperm.slane %v447, 1
    %v456 = vperm.slane %v448, 1
    %v457 = vperm.slane %v449, 1
    %v458 = vperm.slane %v450, 1
    %v587 = vunpack.c.l.b16 %v319
    %v588 = vunpack.c.h.b16 %v319
    %v589 = vunpack.c.l.b16 %v320
    %v590 = vunpack.c.h.b16 %v320
    %v591 = vunpack.c.l.b16 %v321
    %v592 = vunpack.c.h.b16 %v321
    %v593 = vunpack.c.l.b16 %v322
    %v594 = vunpack.c.h.b16 %v322
    %v595 = vunpack.c.l.b16 %v323
    %v596 = vunpack.c.h.b16 %v323
    %v597 = vunpack.c.l.b16 %v324
    %v598 = vunpack.c.h.b16 %v324
    %v599 = vunpack.c.l.b16 %v325
    %v600 = vunpack.c.h.b16 %v325
    %v601 = vunpack.c.l.b16 %v326
    %v602 = vunpack.c.h.b16 %v326
    %v603 = vunpack.c.l.b16 %v327
    %v604 = vunpack.c.h.b16 %v327
    %v605 = vunpack.c.l.b16 %v328
    %v606 = vunpack.c.h.b16 %v328
    %v607 = vunpack.c.l.b16 %v329
    %v608 = vunpack.c.h.b16 %v329
    %v609 = vunpack.c.l.b16 %v330
    %v610 = vunpack.c.h.b16 %v330
    %v611 = vunpack.c.l.b16 %v331
    %v612 = vunpack.c.h.b16 %v331
    %v613 = vunpack.c.l.b16 %v332
    %v614 = vunpack.c.h.b16 %v332
    %v615 = vunpack.c.l.b16 %v333
    %v616 = vunpack.c.h.b16 %v333
    %v617 = vunpack.c.l.b16 %v334
    %v618 = vunpack.c.h.b16 %v334
    %v619 = vunpack.c.l.b16 %v335
    %v620 = vunpack.c.h.b16 %v335
    %v621 = vunpack.c.l.b16 %v336
    %v622 = vunpack.c.h.b16 %v336
    %v623 = vunpack.c.l.b16 %v337
    %v624 = vunpack.c.h.b16 %v337
    %v625 = vunpack.c.l.b16 %v338
    %v626 = vunpack.c.h.b16 %v338
    %v627 = vunpack.c.l.b16 %v339
    %v628 = vunpack.c.h.b16 %v339
    %v629 = vunpack.c.l.b16 %v340
    %v630 = vunpack.c.h.b16 %v340
    %v631 = vunpack.c.l.b16 %v341
    %v632 = vunpack.c.h.b16 %v341
    %v633 = vunpack.c.l.b16 %v342
    %v634 = vunpack.c.h.b16 %v342
    %v635 = vunpack.c.l.b16 %v343
    %v636 = vunpack.c.h.b16 %v343
    %v637 = vunpack.c.l.b16 %v344
    %v638 = vunpack.c.h.b16 %v344
    %v639 = vunpack.c.l.b16 %v345
    %v640 = vunpack.c.h.b16 %v345
    %v641 = vunpack.c.l.b16 %v346
    %v642 = vunpack.c.h.b16 %v346
    %v643 = vunpack.c.l.b16 %v347
    %v644 = vunpack.c.h.b16 %v347
    %v645 = vunpack.c.l.b16 %v348
    %v646 = vunpack.c.h.b16 %v348
    %v647 = vunpack.c.l.b16 %v349
    %v648 = vunpack.c.h.b16 %v349
    %v649 = vunpack.c.l.b16 %v350
    %v650 = vunpack.c.h.b16 %v350
    %v651 = vunpack.c.l.b16 %v351
    %v652 = vunpack.c.h.b16 %v351
    %v653 = vunpack.c.l.b16 %v352
    %v654 = vunpack.c.h.b16 %v352
    %v655 = vunpack.c.l.b16 %v353
    %v656 = vunpack.c.h.b16 %v353
    %v657 = vunpack.c.l.b16 %v354
    %v658 = vunpack.c.h.b16 %v354
    %v659 = vunpack.c.l.b16 %v355
    %v660 = vunpack.c.h.b16 %v355
    %v661 = vunpack.c.l.b16 %v356
    %v662 = vunpack.c.h.b16 %v356
    %v663 = vunpack.c.l.b16 %v357
    %v664 = vunpack.c.h.b16 %v357
    %v665 = vunpack.c.l.b16 %v358
    %v666 = vunpack.c.h.b16 %v358
    %v667 = vunpack.c.l.b16 %v359
    %v668 = vunpack.c.h.b16 %v359
    %v669 = vunpack.c.l.b16 %v360
    %v670 = vunpack.c.h.b16 %v360
    %v671 = vunpack.c.l.b16 %v361
    %v672 = vunpack.c.h.b16 %v361
    %v673 = vunpack.c.l.b16 %v362
    %v674 = vunpack.c.h.b16 %v362
    %v675 = vunpack.c.l.b16 %v363
    %v676 = vunpack.c.h.b16 %v363
    %v677 = vunpack.c.l.b16 %v364
    %v678 = vunpack.c.h.b16 %v364
    %v679 = vunpack.c.l.b16 %v365
    %v680 = vunpack.c.h.b16 %v365
    %v681 = vunpack.c.l.b16 %v366
    %v682 = vunpack.c.h.b16 %v366
    %v683 = vunpack.c.l.b16 %v367
    %v684 = vunpack.c.h.b16 %v367
    %v685 = vunpack.c.l.b16 %v368
    %v686 = vunpack.c.h.b16 %v368
    %v687 = vunpack.c.l.b16 %v369
    %v688 = vunpack.c.h.b16 %v369
    %v689 = vunpack.c.l.b16 %v370
    %v690 = vunpack.c.h.b16 %v370
    %v691 = vunpack.c.l.b16 %v371
    %v692 = vunpack.c.h.b16 %v371
    %v693 = vunpack.c.l.b16 %v372
    %v694 = vunpack.c.h.b16 %v372
    %v695 = vunpack.c.l.b16 %v373
    %v696 = vunpack.c.h.b16 %v373
    %v697 = vunpack.c.l.b16 %v374
    %v698 = vunpack.c.h.b16 %v374
    %v699 = vunpack.c.l.b16 %v375
    %v700 = vunpack.c.h.b16 %v375
    %v701 = vunpack.c.l.b16 %v376
    %v702 = vunpack.c.h.b16 %v376
    %v703 = vunpack.c.l.b16 %v377
    %v704 = vunpack.c.h.b16 %v377
    %v705 = vunpack.c.l.b16 %v378
    %v706 = vunpack.c.h.b16 %v378
    %v707 = vunpack.c.l.b16 %v379
    %v708 = vunpack.c.h.b16 %v379
    %v709 = vunpack.c.l.b16 %v380
    %v710 = vunpack.c.h.b16 %v380
    %v711 = vunpack.c.l.b16 %v381
    %v712 = vunpack.c.h.b16 %v381
    %v713 = vunpack.c.l.b16 %v382
    %v714 = vunpack.c.h.b16 %v382
    %v715 = vunpack.c.l.b16 %v383
    %v716 = vunpack.c.h.b16 %v383
    %v717 = vunpack.c.l.b16 %v384
    %v718 = vunpack.c.h.b16 %v384
    %v719 = vunpack.c.l.b16 %v385
    %v720 = vunpack.c.h.b16 %v385
    %v721 = vunpack.c.l.b16 %v386
    %v722 = vunpack.c.h.b16 %v386
    %v723 = vunpack.c.l.b16 %v387
    %v724 = vunpack.c.h.b16 %v387
    %v725 = vunpack.c.l.b16 %v388
    %v726 = vunpack.c.h.b16 %v388
    %v727 = vunpack.c.l.b16 %v389
    %v728 = vunpack.c.h.b16 %v389
    %v729 = vunpack.c.l.b16 %v390
    %v730 = vunpack.c.h.b16 %v390
    %v731 = vunpack.c.l.b16 %v391
    %v732 = vunpack.c.h.b16 %v391
    %v733 = vunpack.c.l.b16 %v392
    %v734 = vunpack.c.h.b16 %v392
    %v735 = vunpack.c.l.b16 %v393
    %v736 = vunpack.c.h.b16 %v393
    %v737 = vunpack.c.l.b16 %v394
    %v738 = vunpack.c.h.b16 %v394
    %v739 = vunpack.c.l.b16 %v395
    %v740 = vunpack.c.h.b16 %v395
    %v741 = vunpack.c.l.b16 %v396
    %v742 = vunpack.c.h.b16 %v396
    %v743 = vunpack.c.l.b16 %v397
    %v744 = vunpack.c.h.b16 %v397
    %v745 = vunpack.c.l.b16 %v398
    %v746 = vunpack.c.h.b16 %v398
    %v747 = vunpack.c.l.b16 %v399
    %v748 = vunpack.c.h.b16 %v399
    %v749 = vunpack.c.l.b16 %v400
    %v750 = vunpack.c.h.b16 %v400
    %v751 = vunpack.c.l.b16 %v401
    %v752 = vunpack.c.h.b16 %v401
    %v753 = vunpack.c.l.b16 %v402
    %v754 = vunpack.c.h.b16 %v402
    %v755 = vunpack.c.l.b16 %v403
    %v756 = vunpack.c.h.b16 %v403
    %v757 = vunpack.c.l.b16 %v404
    %v758 = vunpack.c.h.b16 %v404
    %v759 = vunpack.c.l.b16 %v405
    %v760 = vunpack.c.h.b16 %v405
    %v761 = vunpack.c.l.b16 %v406
    %v762 = vunpack.c.h.b16 %v406
    %v763 = vunpack.c.l.b16 %v407
    %v764 = vunpack.c.h.b16 %v407
    %v765 = vunpack.c.l.b16 %v408
    %v766 = vunpack.c.h.b16 %v408
    %v767 = vunpack.c.l.b16 %v409
    %v768 = vunpack.c.h.b16 %v409
    %v769 = vunpack.c.l.b16 %v410
    %v770 = vunpack.c.h.b16 %v410
    %v771 = vunpack.c.l.b16 %v411
    %v772 = vunpack.c.h.b16 %v411
    %v773 = vunpack.c.l.b16 %v412
    %v774 = vunpack.c.h.b16 %v412
    %v775 = vunpack.c.l.b16 %v413
    %v776 = vunpack.c.h.b16 %v413
    %v777 = vunpack.c.l.b16 %v414
    %v778 = vunpack.c.h.b16 %v414
    %v779 = vunpack.c.l.b16 %v415
    %v780 = vunpack.c.h.b16 %v415
    %v781 = vunpack.c.l.b16 %v416
    %v782 = vunpack.c.h.b16 %v416
    %v783 = vunpack.c.l.b16 %v417
    %v784 = vunpack.c.h.b16 %v417
    %v785 = vunpack.c.l.b16 %v418
    %v786 = vunpack.c.h.b16 %v418
    %v787 = vunpack.c.l.b16 %v419
    %v788 = vunpack.c.h.b16 %v419
    %v789 = vunpack.c.l.b16 %v420
    %v790 = vunpack.c.h.b16 %v420
    %v791 = vunpack.c.l.b16 %v421
    %v792 = vunpack.c.h.b16 %v421
    %v793 = vunpack.c.l.b16 %v422
    %v794 = vunpack.c.h.b16 %v422
    %v795 = vunpack.c.l.b16 %v423
    %v796 = vunpack.c.h.b16 %v423
    %v797 = vunpack.c.l.b16 %v424
    %v798 = vunpack.c.h.b16 %v424
    %v799 = vunpack.c.l.b16 %v425
    %v800 = vunpack.c.h.b16 %v425
    %v801 = vunpack.c.l.b16 %v426
    %v802 = vunpack.c.h.b16 %v426
    %v803 = vunpack.c.l.b16 %v427
    %v804 = vunpack.c.h.b16 %v427
    %v805 = vunpack.c.l.b16 %v428
    %v806 = vunpack.c.h.b16 %v428
    %v807 = vunpack.c.l.b16 %v429
    %v808 = vunpack.c.h.b16 %v429
    %v809 = vunpack.c.l.b16 %v430
    %v810 = vunpack.c.h.b16 %v430
    %v811 = vunpack.c.l.b16 %v431
    %v812 = vunpack.c.h.b16 %v431
    %v813 = vunpack.c.l.b16 %v432
    %v814 = vunpack.c.h.b16 %v432
    %v815 = vunpack.c.l.b16 %v433
    %v816 = vunpack.c.h.b16 %v433
    %v817 = vunpack.c.l.b16 %v434
    %v818 = vunpack.c.h.b16 %v434
    %v819 = vunpack.c.l.b16 %v435
    %v820 = vunpack.c.h.b16 %v435
    %v821 = vunpack.c.l.b16 %v436
    %v822 = vunpack.c.h.b16 %v436
    %v823 = vunpack.c.l.b16 %v437
    %v824 = vunpack.c.h.b16 %v437
    %v825 = vunpack.c.l.b16 %v438
    %v826 = vunpack.c.h.b16 %v438
    %v827 = vunpack.c.l.b16 %v439
    %v828 = vunpack.c.h.b16 %v439
    %v829 = vunpack.c.l.b16 %v440
    %v830 = vunpack.c.h.b16 %v440
    %v831 = vunpack.c.l.b16 %v441
    %v832 = vunpack.c.h.b16 %v441
    %v833 = vunpack.c.l.b16 %v442
    %v834 = vunpack.c.h.b16 %v442
    %v835 = vunpack.c.l.b16 %v443
    %v836 = vunpack.c.h.b16 %v443
    %v837 = vunpack.c.l.b16 %v444
    %v838 = vunpack.c.h.b16 %v444
    %v839 = vunpack.c.l.b16 %v445
    %v840 = vunpack.c.h.b16 %v445
    %v841 = vunpack.c.l.b16 %v446
    %v842 = vunpack.c.h.b16 %v446
    %v843 = vpack.c.b16 %v591, %v587
    %v844 = vpack.c.b16 %v592, %v588
    %v845 = vpack.c.b16 %v593, %v589
    %v846 = vpack.c.b16 %v594, %v590
    %v847 = vpack.c.b16 %v599, %v595
    %v848 = vpack.c.b16 %v600, %v596
    %v849 = vpack.c.b16 %v601, %v597
    %v850 = vpack.c.b16 %v602, %v598
    %v851 = vpack.c.b16 %v607, %v603
    %v852 = vpack.c.b16 %v608, %v604
    %v853 = vpack.c.b16 %v609, %v605
    %v854 = vpack.c.b16 %v610, %v606
    %v855 = vpack.c.b16 %v615, %v611
    %v856 = vpack.c.b16 %v616, %v612
    %v857 = vpack.c.b16 %v617, %v613
    %v858 = vpack.c.b16 %v618, %v614
    %v859 = vpack.c.b16 %v623, %v619
    %v860 = vpack.c.b16 %v624, %v620
    %v861 = vpack.c.b16 %v625, %v621
    %v862 = vpack.c.b16 %v626, %v622
    %v863 = vpack.c.b16 %v631, %v627
    %v864 = vpack.c.b16 %v632, %v628
    %v865 = vpack.c.b16 %v633, %v629
    %v866 = vpack.c.b16 %v634, %v630
    %v867 = vpack.c.b16 %v639, %v635
    %v868 = vpack.c.b16 %v640, %v636
    %v869 = vpack.c.b16 %v641, %v637
    %v870 = vpack.c.b16 %v642, %v638
    %v871 = vpack.c.b16 %v647, %v643
    %v872 = vpack.c.b16 %v648, %v644
    %v873 = vpack.c.b16 %v649, %v645
    %v874 = vpack.c.b16 %v650, %v646
    %v875 = vpack.c.b16 %v655, %v651
    %v876 = vpack.c.b16 %v656, %v652
    %v877 = vpack.c.b16 %v657, %v653
    %v878 = vpack.c.b16 %v658, %v654
    %v879 = vpack.c.b16 %v663, %v659
    %v880 = vpack.c.b16 %v664, %v660
    %v881 = vpack.c.b16 %v665, %v661
    %v882 = vpack.c.b16 %v666, %v662
    %v883 = vpack.c.b16 %v671, %v667
    %v884 = vpack.c.b16 %v672, %v668
    %v885 = vpack.c.b16 %v673, %v669
    %v886 = vpack.c.b16 %v674, %v670
    %v887 = vpack.c.b16 %v679, %v675
    %v888 = vpack.c.b16 %v680, %v676
    %v889 = vpack.c.b16 %v681, %v677
    %v890 = vpack.c.b16 %v682, %v678
    %v891 = vpack.c.b16 %v687, %v683
    %v892 = vpack.c.b16 %v688, %v684
    %v893 = vpack.c.b16 %v689, %v685
    %v894 = vpack.c.b16 %v690, %v686
    %v895 = vpack.c.b16 %v695, %v691
    %v896 = vpack.c.b16 %v696, %v692
    %v897 = vpack.c.b16 %v697, %v693
    %v898 = vpack.c.b16 %v698, %v694
    %v899 = vpack.c.b16 %v703, %v699
    %v900 = vpack.c.b16 %v704, %v700
    %v901 = vpack.c.b16 %v705, %v701
    %v902 = vpack.c.b16 %v706, %v702
    %v903 = vpack.c.b16 %v711, %v707
    %v904 = vpack.c.b16 %v712, %v708
    %v905 = vpack.c.b16 %v713, %v709
    %v906 = vpack.c.b16 %v714, %v710
    %v907 = vpack.c.b16 %v719, %v715
    %v908 = vpack.c.b16 %v720, %v716
    %v909 = vpack.c.b16 %v721, %v717
    %v910 = vpack.c.b16 %v722, %v718
    %v911 = vpack.c.b16 %v727, %v723
    %v912 = vpack.c.b16 %v728, %v724
    %v913 = vpack.c.b16 %v729, %v725
    %v914 = vpack.c.b16 %v730, %v726
    %v915 = vpack.c.b16 %v735, %v731
    %v916 = vpack.c.b16 %v736, %v732
    %v917 = vpack.c.b16 %v737, %v733
    %v918 = vpack.c.b16 %v738, %v734
    %v919 = vpack.c.b16 %v743, %v739
    %v920 = vpack.c.b16 %v744, %v740
    %v921 = vpack.c.b16 %v745, %v741
    %v922 = vpack.c.b16 %v746, %v742
    %v923 = vpack.c.b16 %v751, %v747
    %v924 = vpack.c.b16 %v752, %v748
    %v925 = vpack.c.b16 %v753, %v749
    %v926 = vpack.c.b16 %v754, %v750
    %v927 = vpack.c.b16 %v759, %v755
    %v928 = vpack.c.b16 %v760, %v756
    %v929 = vpack.c.b16 %v761, %v757
    %v930 = vpack.c.b16 %v762, %v758
    %v931 = vpack.c.b16 %v767, %v763
    %v932 = vpack.c.b16 %v768, %v764
    %v933 = vpack.c.b16 %v769, %v765
    %v934 = vpack.c.b16 %v770, %v766
    %v935 = vpack.c.b16 %v775, %v771
    %v936 = vpack.c.b16 %v776, %v772
    %v937 = vpack.c.b16 %v777, %v773
    %v938 = vpack.c.b16 %v778, %v774
    %v939 = vpack.c.b16 %v783, %v779
    %v940 = vpack.c.b16 %v784, %v780
    %v941 = vpack.c.b16 %v785, %v781
    %v942 = vpack.c.b16 %v786, %v782
    %v943 = vpack.c.b16 %v791, %v787
    %v944 = vpack.c.b16 %v792, %v788
    %v945 = vpack.c.b16 %v793, %v789
    %v946 = vpack.c.b16 %v794, %v790
    %v947 = vpack.c.b16 %v799, %v795
    %v948 = vpack.c.b16 %v800, %v796
    %v949 = vpack.c.b16 %v801, %v797
    %v950 = vpack.c.b16 %v802, %v798
    %v951 = vpack.c.b16 %v807, %v803
    %v952 = vpack.c.b16 %v808, %v804
    %v953 = vpack.c.b16 %v809, %v805
    %v954 = vpack.c.b16 %v810, %v806
    %v955 = vpack.c.b16 %v815, %v811
    %v956 = vpack.c.b16 %v816, %v812
    %v957 = vpack.c.b16 %v817, %v813
    %v958 = vpack.c.b16 %v818, %v814
    %v959 = vpack.c.b16 %v823, %v819
    %v960 = vpack.c.b16 %v824, %v820
    %v961 = vpack.c.b16 %v825, %v821
    %v962 = vpack.c.b16 %v826, %v822
    %v963 = vpack.c.b16 %v831, %v827
    %v964 = vpack.c.b16 %v832, %v828
    %v965 = vpack.c.b16 %v833, %v829
    %v966 = vpack.c.b16 %v834, %v830
    %v967 = vpack.c.b16 %v839, %v835
    %v968 = vpack.c.b16 %v840, %v836
    %v969 = vpack.c.b16 %v841, %v837
    %v970 = vpack.c.b16 %v842, %v838
    %1099 = vmatpush.bf16.msra.mxu0 %v871
    %1100 = vmatpush.bf16.msra.mxu0 %v867
    %1101 = vmatpush.bf16.msra.mxu0 %v863
    %1102 = vmatpush.bf16.msra.mxu0 %v859
    %1103 = vmatpush.bf16.msra.mxu0 %v855
    %1104 = vmatpush.bf16.msra.mxu0 %v851
    %1105 = vmatpush.bf16.msra.mxu0 %v847
    %1106 = vmatpush.bf16.msra.mxu0 %v843
    %1107 = vmatmul.bf16.gmra.mxu0 %v303
    %v1108 = vpop.f32.mrf.mxu0
    %v1109 = vadd.f32 %v455, %v1108
    %v1110 = vpop.f32.mrf.mxu0
    %v1111 = vadd.f32 %v455, %v1110
    %1112 = vmatmul.bf16.gmra.mxu0 %v307
    %v1113 = vpop.f32.mrf.mxu0
    %v1114 = vadd.f32 %v455, %v1113
    %v1115 = vpop.f32.mrf.mxu0
    %v1116 = vadd.f32 %v455, %v1115
    %1117 = vmatmul.bf16.gmra.mxu0 %v311
    %v1118 = vpop.f32.mrf.mxu0
    %v1119 = vadd.f32 %v455, %v1118
    %v1120 = vpop.f32.mrf.mxu0
    %v1121 = vadd.f32 %v455, %v1120
    %1122 = vmatmul.bf16.gmra.mxu0 %v315
    %v1123 = vpop.f32.mrf.mxu0
    %v1124 = vadd.f32 %v455, %v1123
    %v1125 = vpop.f32.mrf.mxu0
    %v1126 = vadd.f32 %v455, %v1125
    %1127 = vdwg.mxu0
    %1128 = vmatpush.bf16.msra.mxu0 %v903
    %1129 = vmatpush.bf16.msra.mxu0 %v899
    %1130 = vmatpush.bf16.msra.mxu0 %v895
    %1131 = vmatpush.bf16.msra.mxu0 %v891
    %1132 = vmatpush.bf16.msra.mxu0 %v887
    %1133 = vmatpush.bf16.msra.mxu0 %v883
    %1134 = vmatpush.bf16.msra.mxu0 %v879
    %1135 = vmatpush.bf16.msra.mxu0 %v875
    %1136 = vmatmul.bf16.gmra.mxu0 %v304
    %v1137 = vpop.f32.mrf.mxu0
    %v1138 = vadd.f32 %v1109, %v1137
    %v1139 = vpop.f32.mrf.mxu0
    %v1140 = vadd.f32 %v1111, %v1139
    %1141 = vmatmul.bf16.gmra.mxu0 %v308
    %v1142 = vpop.f32.mrf.mxu0
    %v1143 = vadd.f32 %v1114, %v1142
    %v1144 = vpop.f32.mrf.mxu0
    %v1145 = vadd.f32 %v1116, %v1144
    %1146 = vmatmul.bf16.gmra.mxu0 %v312
    %v1147 = vpop.f32.mrf.mxu0
    %v1148 = vadd.f32 %v1119, %v1147
    %v1149 = vpop.f32.mrf.mxu0
    %v1150 = vadd.f32 %v1121, %v1149
    %1151 = vmatmul.bf16.gmra.mxu0 %v316
    %v1152 = vpop.f32.mrf.mxu0
    %v1153 = vadd.f32 %v1124, %v1152
    %v1154 = vpop.f32.mrf.mxu0
    %v1155 = vadd.f32 %v1126, %v1154
    %1156 = vdwg.mxu0
    %1157 = vmatpush.bf16.msra.mxu0 %v935
    %1158 = vmatpush.bf16.msra.mxu0 %v931
    %1159 = vmatpush.bf16.msra.mxu0 %v927
    %1160 = vmatpush.bf16.msra.mxu0 %v923
    %1161 = vmatpush.bf16.msra.mxu0 %v919
    %1162 = vmatpush.bf16.msra.mxu0 %v915
    %1163 = vmatpush.bf16.msra.mxu0 %v911
    %1164 = vmatpush.bf16.msra.mxu0 %v907
    %1165 = vmatmul.bf16.gmra.mxu0 %v305
    %v1166 = vpop.f32.mrf.mxu0
    %v1167 = vadd.f32 %v1138, %v1166
    %v1168 = vpop.f32.mrf.mxu0
    %v1169 = vadd.f32 %v1140, %v1168
    %1170 = vmatmul.bf16.gmra.mxu0 %v309
    %v1171 = vpop.f32.mrf.mxu0
    %v1172 = vadd.f32 %v1143, %v1171
    %v1173 = vpop.f32.mrf.mxu0
    %v1174 = vadd.f32 %v1145, %v1173
    %1175 = vmatmul.bf16.gmra.mxu0 %v313
    %v1176 = vpop.f32.mrf.mxu0
    %v1177 = vadd.f32 %v1148, %v1176
    %v1178 = vpop.f32.mrf.mxu0
    %v1179 = vadd.f32 %v1150, %v1178
    %1180 = vmatmul.bf16.gmra.mxu0 %v317
    %v1181 = vpop.f32.mrf.mxu0
    %v1182 = vadd.f32 %v1153, %v1181
    %v1183 = vpop.f32.mrf.mxu0
    %v1184 = vadd.f32 %v1155, %v1183
    %1185 = vdwg.mxu0
    %1186 = vmatpush.bf16.msra.mxu0 %v967
    %1187 = vmatpush.bf16.msra.mxu0 %v963
    %1188 = vmatpush.bf16.msra.mxu0 %v959
    %1189 = vmatpush.bf16.msra.mxu0 %v955
    %1190 = vmatpush.bf16.msra.mxu0 %v951
    %1191 = vmatpush.bf16.msra.mxu0 %v947
    %1192 = vmatpush.bf16.msra.mxu0 %v943
    %1193 = vmatpush.bf16.msra.mxu0 %v939
    %1194 = vmatmul.bf16.gmra.mxu0 %v306
    %v1195 = vpop.f32.mrf.mxu0
    %v1196 = vadd.f32 %v1167, %v1195
    %v1197 = vpop.f32.mrf.mxu0
    %v1198 = vadd.f32 %v1169, %v1197
    %1199 = vmatmul.bf16.gmra.mxu0 %v310
    %v1200 = vpop.f32.mrf.mxu0
    %v1201 = vadd.f32 %v1172, %v1200
    %v1202 = vpop.f32.mrf.mxu0
    %v1203 = vadd.f32 %v1174, %v1202
    %1204 = vmatmul.bf16.gmra.mxu0 %v314
    %v1205 = vpop.f32.mrf.mxu0
    %v1206 = vadd.f32 %v1177, %v1205
    %v1207 = vpop.f32.mrf.mxu0
    %v1208 = vadd.f32 %v1179, %v1207
    %1209 = vmatmul.bf16.gmra.mxu0 %v318
    %v1210 = vpop.f32.mrf.mxu0
    %v1211 = vadd.f32 %v1182, %v1210
    %v1212 = vpop.f32.mrf.mxu0
    %v1213 = vadd.f32 %v1184, %v1212
    %1214 = vdwg.mxu0
    %1215 = vmatpush.bf16.msra.mxu0 %v872
    %1216 = vmatpush.bf16.msra.mxu0 %v868
    %1217 = vmatpush.bf16.msra.mxu0 %v864
    %1218 = vmatpush.bf16.msra.mxu0 %v860
    %1219 = vmatpush.bf16.msra.mxu0 %v856
    %1220 = vmatpush.bf16.msra.mxu0 %v852
    %1221 = vmatpush.bf16.msra.mxu0 %v848
    %1222 = vmatpush.bf16.msra.mxu0 %v844
    %1223 = vmatmul.bf16.gmra.mxu0 %v303
    %v1224 = vpop.f32.mrf.mxu0
    %v1225 = vadd.f32 %v456, %v1224
    %v1226 = vpop.f32.mrf.mxu0
    %v1227 = vadd.f32 %v456, %v1226
    %1228 = vmatmul.bf16.gmra.mxu0 %v307
    %v1229 = vpop.f32.mrf.mxu0
    %v1230 = vadd.f32 %v456, %v1229
    %v1231 = vpop.f32.mrf.mxu0
    %v1232 = vadd.f32 %v456, %v1231
    %1233 = vmatmul.bf16.gmra.mxu0 %v311
    %v1234 = vpop.f32.mrf.mxu0
    %v1235 = vadd.f32 %v456, %v1234
    %v1236 = vpop.f32.mrf.mxu0
    %v1237 = vadd.f32 %v456, %v1236
    %1238 = vmatmul.bf16.gmra.mxu0 %v315
    %v1239 = vpop.f32.mrf.mxu0
    %v1240 = vadd.f32 %v456, %v1239
    %v1241 = vpop.f32.mrf.mxu0
    %v1242 = vadd.f32 %v456, %v1241
    %1243 = vdwg.mxu0
    %1244 = vmatpush.bf16.msra.mxu0 %v904
    %1245 = vmatpush.bf16.msra.mxu0 %v900
    %1246 = vmatpush.bf16.msra.mxu0 %v896
    %1247 = vmatpush.bf16.msra.mxu0 %v892
    %1248 = vmatpush.bf16.msra.mxu0 %v888
    %1249 = vmatpush.bf16.msra.mxu0 %v884
    %1250 = vmatpush.bf16.msra.mxu0 %v880
    %1251 = vmatpush.bf16.msra.mxu0 %v876
    %1252 = vmatmul.bf16.gmra.mxu0 %v304
    %v1253 = vpop.f32.mrf.mxu0
    %v1254 = vadd.f32 %v1225, %v1253
    %v1255 = vpop.f32.mrf.mxu0
    %v1256 = vadd.f32 %v1227, %v1255
    %1257 = vmatmul.bf16.gmra.mxu0 %v308
    %v1258 = vpop.f32.mrf.mxu0
    %v1259 = vadd.f32 %v1230, %v1258
    %v1260 = vpop.f32.mrf.mxu0
    %v1261 = vadd.f32 %v1232, %v1260
    %1262 = vmatmul.bf16.gmra.mxu0 %v312
    %v1263 = vpop.f32.mrf.mxu0
    %v1264 = vadd.f32 %v1235, %v1263
    %v1265 = vpop.f32.mrf.mxu0
    %v1266 = vadd.f32 %v1237, %v1265
    %1267 = vmatmul.bf16.gmra.mxu0 %v316
    %v1268 = vpop.f32.mrf.mxu0
    %v1269 = vadd.f32 %v1240, %v1268
    %v1270 = vpop.f32.mrf.mxu0
    %v1271 = vadd.f32 %v1242, %v1270
    %1272 = vdwg.mxu0
    %1273 = vmatpush.bf16.msra.mxu0 %v936
    %1274 = vmatpush.bf16.msra.mxu0 %v932
    %1275 = vmatpush.bf16.msra.mxu0 %v928
    %1276 = vmatpush.bf16.msra.mxu0 %v924
    %1277 = vmatpush.bf16.msra.mxu0 %v920
    %1278 = vmatpush.bf16.msra.mxu0 %v916
    %1279 = vmatpush.bf16.msra.mxu0 %v912
    %1280 = vmatpush.bf16.msra.mxu0 %v908
    %1281 = vmatmul.bf16.gmra.mxu0 %v305
    %v1282 = vpop.f32.mrf.mxu0
    %v1283 = vadd.f32 %v1254, %v1282
    %v1284 = vpop.f32.mrf.mxu0
    %v1285 = vadd.f32 %v1256, %v1284
    %1286 = vmatmul.bf16.gmra.mxu0 %v309
    %v1287 = vpop.f32.mrf.mxu0
    %v1288 = vadd.f32 %v1259, %v1287
    %v1289 = vpop.f32.mrf.mxu0
    %v1290 = vadd.f32 %v1261, %v1289
    %1291 = vmatmul.bf16.gmra.mxu0 %v313
    %v1292 = vpop.f32.mrf.mxu0
    %v1293 = vadd.f32 %v1264, %v1292
    %v1294 = vpop.f32.mrf.mxu0
    %v1295 = vadd.f32 %v1266, %v1294
    %1296 = vmatmul.bf16.gmra.mxu0 %v317
    %v1297 = vpop.f32.mrf.mxu0
    %v1298 = vadd.f32 %v1269, %v1297
    %v1299 = vpop.f32.mrf.mxu0
    %v1300 = vadd.f32 %v1271, %v1299
    %1301 = vdwg.mxu0
    %1302 = vmatpush.bf16.msra.mxu0 %v968
    %1303 = vmatpush.bf16.msra.mxu0 %v964
    %1304 = vmatpush.bf16.msra.mxu0 %v960
    %1305 = vmatpush.bf16.msra.mxu0 %v956
    %1306 = vmatpush.bf16.msra.mxu0 %v952
    %1307 = vmatpush.bf16.msra.mxu0 %v948
    %1308 = vmatpush.bf16.msra.mxu0 %v944
    %1309 = vmatpush.bf16.msra.mxu0 %v940
    %1310 = vmatmul.bf16.gmra.mxu0 %v306
    %v1311 = vpop.f32.mrf.mxu0
    %v1312 = vadd.f32 %v1283, %v1311
    %v1313 = vpop.f32.mrf.mxu0
    %v1314 = vadd.f32 %v1285, %v1313
    %1315 = vmatmul.bf16.gmra.mxu0 %v310
    %v1316 = vpop.f32.mrf.mxu0
    %v1317 = vadd.f32 %v1288, %v1316
    %v1318 = vpop.f32.mrf.mxu0
    %v1319 = vadd.f32 %v1290, %v1318
    %1320 = vmatmul.bf16.gmra.mxu0 %v314
    %v1321 = vpop.f32.mrf.mxu0
    %v1322 = vadd.f32 %v1293, %v1321
    %v1323 = vpop.f32.mrf.mxu0
    %v1324 = vadd.f32 %v1295, %v1323
    %1325 = vmatmul.bf16.gmra.mxu0 %v318
    %v1326 = vpop.f32.mrf.mxu0
    %v1327 = vadd.f32 %v1298, %v1326
    %v1328 = vpop.f32.mrf.mxu0
    %v1329 = vadd.f32 %v1300, %v1328
    %1330 = vdwg.mxu0
    %1331 = vmatpush.bf16.msra.mxu0 %v873
    %1332 = vmatpush.bf16.msra.mxu0 %v869
    %1333 = vmatpush.bf16.msra.mxu0 %v865
    %1334 = vmatpush.bf16.msra.mxu0 %v861
    %1335 = vmatpush.bf16.msra.mxu0 %v857
    %1336 = vmatpush.bf16.msra.mxu0 %v853
    %1337 = vmatpush.bf16.msra.mxu0 %v849
    %1338 = vmatpush.bf16.msra.mxu0 %v845
    %1339 = vmatmul.bf16.gmra.mxu0 %v303
    %v1340 = vpop.f32.mrf.mxu0
    %v1341 = vadd.f32 %v457, %v1340
    %v1342 = vpop.f32.mrf.mxu0
    %v1343 = vadd.f32 %v457, %v1342
    %1344 = vmatmul.bf16.gmra.mxu0 %v307
    %v1345 = vpop.f32.mrf.mxu0
    %v1346 = vadd.f32 %v457, %v1345
    %v1347 = vpop.f32.mrf.mxu0
    %v1348 = vadd.f32 %v457, %v1347
    %1349 = vmatmul.bf16.gmra.mxu0 %v311
    %v1350 = vpop.f32.mrf.mxu0
    %v1351 = vadd.f32 %v457, %v1350
    %v1352 = vpop.f32.mrf.mxu0
    %v1353 = vadd.f32 %v457, %v1352
    %1354 = vmatmul.bf16.gmra.mxu0 %v315
    %v1355 = vpop.f32.mrf.mxu0
    %v1356 = vadd.f32 %v457, %v1355
    %v1357 = vpop.f32.mrf.mxu0
    %v1358 = vadd.f32 %v457, %v1357
    %1359 = vdwg.mxu0
    %1360 = vmatpush.bf16.msra.mxu0 %v905
    %1361 = vmatpush.bf16.msra.mxu0 %v901
    %1362 = vmatpush.bf16.msra.mxu0 %v897
    %1363 = vmatpush.bf16.msra.mxu0 %v893
    %1364 = vmatpush.bf16.msra.mxu0 %v889
    %1365 = vmatpush.bf16.msra.mxu0 %v885
    %1366 = vmatpush.bf16.msra.mxu0 %v881
    %1367 = vmatpush.bf16.msra.mxu0 %v877
    %1368 = vmatmul.bf16.gmra.mxu0 %v304
    %v1369 = vpop.f32.mrf.mxu0
    %v1370 = vadd.f32 %v1341, %v1369
    %v1371 = vpop.f32.mrf.mxu0
    %v1372 = vadd.f32 %v1343, %v1371
    %1373 = vmatmul.bf16.gmra.mxu0 %v308
    %v1374 = vpop.f32.mrf.mxu0
    %v1375 = vadd.f32 %v1346, %v1374
    %v1376 = vpop.f32.mrf.mxu0
    %v1377 = vadd.f32 %v1348, %v1376
    %1378 = vmatmul.bf16.gmra.mxu0 %v312
    %v1379 = vpop.f32.mrf.mxu0
    %v1380 = vadd.f32 %v1351, %v1379
    %v1381 = vpop.f32.mrf.mxu0
    %v1382 = vadd.f32 %v1353, %v1381
    %1383 = vmatmul.bf16.gmra.mxu0 %v316
    %v1384 = vpop.f32.mrf.mxu0
    %v1385 = vadd.f32 %v1356, %v1384
    %v1386 = vpop.f32.mrf.mxu0
    %v1387 = vadd.f32 %v1358, %v1386
    %1388 = vdwg.mxu0
    %1389 = vmatpush.bf16.msra.mxu0 %v937
    %1390 = vmatpush.bf16.msra.mxu0 %v933
    %1391 = vmatpush.bf16.msra.mxu0 %v929
    %1392 = vmatpush.bf16.msra.mxu0 %v925
    %1393 = vmatpush.bf16.msra.mxu0 %v921
    %1394 = vmatpush.bf16.msra.mxu0 %v917
    %1395 = vmatpush.bf16.msra.mxu0 %v913
    %1396 = vmatpush.bf16.msra.mxu0 %v909
    %1397 = vmatmul.bf16.gmra.mxu0 %v305
    %v1398 = vpop.f32.mrf.mxu0
    %v1399 = vadd.f32 %v1370, %v1398
    %v1400 = vpop.f32.mrf.mxu0
    %v1401 = vadd.f32 %v1372, %v1400
    %1402 = vmatmul.bf16.gmra.mxu0 %v309
    %v1403 = vpop.f32.mrf.mxu0
    %v1404 = vadd.f32 %v1375, %v1403
    %v1405 = vpop.f32.mrf.mxu0
    %v1406 = vadd.f32 %v1377, %v1405
    %1407 = vmatmul.bf16.gmra.mxu0 %v313
    %v1408 = vpop.f32.mrf.mxu0
    %v1409 = vadd.f32 %v1380, %v1408
    %v1410 = vpop.f32.mrf.mxu0
    %v1411 = vadd.f32 %v1382, %v1410
    %1412 = vmatmul.bf16.gmra.mxu0 %v317
    %v1413 = vpop.f32.mrf.mxu0
    %v1414 = vadd.f32 %v1385, %v1413
    %v1415 = vpop.f32.mrf.mxu0
    %v1416 = vadd.f32 %v1387, %v1415
    %1417 = vdwg.mxu0
    %1418 = vmatpush.bf16.msra.mxu0 %v969
    %1419 = vmatpush.bf16.msra.mxu0 %v965
    %1420 = vmatpush.bf16.msra.mxu0 %v961
    %1421 = vmatpush.bf16.msra.mxu0 %v957
    %1422 = vmatpush.bf16.msra.mxu0 %v953
    %1423 = vmatpush.bf16.msra.mxu0 %v949
    %1424 = vmatpush.bf16.msra.mxu0 %v945
    %1425 = vmatpush.bf16.msra.mxu0 %v941
    %1426 = vmatmul.bf16.gmra.mxu0 %v306
    %v1427 = vpop.f32.mrf.mxu0
    %v1428 = vadd.f32 %v1399, %v1427
    %v1429 = vpop.f32.mrf.mxu0
    %v1430 = vadd.f32 %v1401, %v1429
    %1431 = vmatmul.bf16.gmra.mxu0 %v310
    %v1432 = vpop.f32.mrf.mxu0
    %v1433 = vadd.f32 %v1404, %v1432
    %v1434 = vpop.f32.mrf.mxu0
    %v1435 = vadd.f32 %v1406, %v1434
    %1436 = vmatmul.bf16.gmra.mxu0 %v314
    %v1437 = vpop.f32.mrf.mxu0
    %v1438 = vadd.f32 %v1409, %v1437
    %v1439 = vpop.f32.mrf.mxu0
    %v1440 = vadd.f32 %v1411, %v1439
    %1441 = vmatmul.bf16.gmra.mxu0 %v318
    %v1442 = vpop.f32.mrf.mxu0
    %v1443 = vadd.f32 %v1414, %v1442
    %v1444 = vpop.f32.mrf.mxu0
    %v1445 = vadd.f32 %v1416, %v1444
    %1446 = vdwg.mxu0
    %1447 = vmatpush.bf16.msra.mxu0 %v874
    %1448 = vmatpush.bf16.msra.mxu0 %v870
    %1449 = vmatpush.bf16.msra.mxu0 %v866
    %1450 = vmatpush.bf16.msra.mxu0 %v862
    %1451 = vmatpush.bf16.msra.mxu0 %v858
    %1452 = vmatpush.bf16.msra.mxu0 %v854
    %1453 = vmatpush.bf16.msra.mxu0 %v850
    %1454 = vmatpush.bf16.msra.mxu0 %v846
    %1455 = vmatmul.bf16.gmra.mxu0 %v303
    %v1456 = vpop.f32.mrf.mxu0
    %v1457 = vadd.f32 %v458, %v1456
    %v1458 = vpop.f32.mrf.mxu0
    %v1459 = vadd.f32 %v458, %v1458
    %1460 = vmatmul.bf16.gmra.mxu0 %v307
    %v1461 = vpop.f32.mrf.mxu0
    %v1462 = vadd.f32 %v458, %v1461
    %v1463 = vpop.f32.mrf.mxu0
    %v1464 = vadd.f32 %v458, %v1463
    %1465 = vmatmul.bf16.gmra.mxu0 %v311
    %v1466 = vpop.f32.mrf.mxu0
    %v1467 = vadd.f32 %v458, %v1466
    %v1468 = vpop.f32.mrf.mxu0
    %v1469 = vadd.f32 %v458, %v1468
    %1470 = vmatmul.bf16.gmra.mxu0 %v315
    %v1471 = vpop.f32.mrf.mxu0
    %v1472 = vadd.f32 %v458, %v1471
    %v1473 = vpop.f32.mrf.mxu0
    %v1474 = vadd.f32 %v458, %v1473
    %1475 = vdwg.mxu0
    %1476 = vmatpush.bf16.msra.mxu0 %v906
    %1477 = vmatpush.bf16.msra.mxu0 %v902
    %1478 = vmatpush.bf16.msra.mxu0 %v898
    %1479 = vmatpush.bf16.msra.mxu0 %v894
    %1480 = vmatpush.bf16.msra.mxu0 %v890
    %1481 = vmatpush.bf16.msra.mxu0 %v886
    %1482 = vmatpush.bf16.msra.mxu0 %v882
    %1483 = vmatpush.bf16.msra.mxu0 %v878
    %1484 = vmatmul.bf16.gmra.mxu0 %v304
    %v1485 = vpop.f32.mrf.mxu0
    %v1486 = vadd.f32 %v1457, %v1485
    %v1487 = vpop.f32.mrf.mxu0
    %v1488 = vadd.f32 %v1459, %v1487
    %1489 = vmatmul.bf16.gmra.mxu0 %v308
    %v1490 = vpop.f32.mrf.mxu0
    %v1491 = vadd.f32 %v1462, %v1490
    %v1492 = vpop.f32.mrf.mxu0
    %v1493 = vadd.f32 %v1464, %v1492
    %1494 = vmatmul.bf16.gmra.mxu0 %v312
    %v1495 = vpop.f32.mrf.mxu0
    %v1496 = vadd.f32 %v1467, %v1495
    %v1497 = vpop.f32.mrf.mxu0
    %v1498 = vadd.f32 %v1469, %v1497
    %1499 = vmatmul.bf16.gmra.mxu0 %v316
    %v1500 = vpop.f32.mrf.mxu0
    %v1501 = vadd.f32 %v1472, %v1500
    %v1502 = vpop.f32.mrf.mxu0
    %v1503 = vadd.f32 %v1474, %v1502
    %1504 = vdwg.mxu0
    %1505 = vmatpush.bf16.msra.mxu0 %v938
    %1506 = vmatpush.bf16.msra.mxu0 %v934
    %1507 = vmatpush.bf16.msra.mxu0 %v930
    %1508 = vmatpush.bf16.msra.mxu0 %v926
    %1509 = vmatpush.bf16.msra.mxu0 %v922
    %1510 = vmatpush.bf16.msra.mxu0 %v918
    %1511 = vmatpush.bf16.msra.mxu0 %v914
    %1512 = vmatpush.bf16.msra.mxu0 %v910
    %1513 = vmatmul.bf16.gmra.mxu0 %v305
    %v1514 = vpop.f32.mrf.mxu0
    %v1515 = vadd.f32 %v1486, %v1514
    %v1516 = vpop.f32.mrf.mxu0
    %v1517 = vadd.f32 %v1488, %v1516
    %1518 = vmatmul.bf16.gmra.mxu0 %v309
    %v1519 = vpop.f32.mrf.mxu0
    %v1520 = vadd.f32 %v1491, %v1519
    %v1521 = vpop.f32.mrf.mxu0
    %v1522 = vadd.f32 %v1493, %v1521
    %1523 = vmatmul.bf16.gmra.mxu0 %v313
    %v1524 = vpop.f32.mrf.mxu0
    %v1525 = vadd.f32 %v1496, %v1524
    %v1526 = vpop.f32.mrf.mxu0
    %v1527 = vadd.f32 %v1498, %v1526
    %1528 = vmatmul.bf16.gmra.mxu0 %v317
    %v1529 = vpop.f32.mrf.mxu0
    %v1530 = vadd.f32 %v1501, %v1529
    %v1531 = vpop.f32.mrf.mxu0
    %v1532 = vadd.f32 %v1503, %v1531
    %1533 = vdwg.mxu0
    %1534 = vmatpush.bf16.msra.mxu0 %v970
    %1535 = vmatpush.bf16.msra.mxu0 %v966
    %1536 = vmatpush.bf16.msra.mxu0 %v962
    %1537 = vmatpush.bf16.msra.mxu0 %v958
    %1538 = vmatpush.bf16.msra.mxu0 %v954
    %1539 = vmatpush.bf16.msra.mxu0 %v950
    %1540 = vmatpush.bf16.msra.mxu0 %v946
    %1541 = vmatpush.bf16.msra.mxu0 %v942
    %1542 = vmatmul.bf16.gmra.mxu0 %v306
    %v1543 = vpop.f32.mrf.mxu0
    %v1544 = vadd.f32 %v1515, %v1543
    %v1545 = vpop.f32.mrf.mxu0
    %v1546 = vadd.f32 %v1517, %v1545
    %1547 = vmatmul.bf16.gmra.mxu0 %v310
    %v1548 = vpop.f32.mrf.mxu0
    %v1549 = vadd.f32 %v1520, %v1548
    %v1550 = vpop.f32.mrf.mxu0
    %v1551 = vadd.f32 %v1522, %v1550
    %1552 = vmatmul.bf16.gmra.mxu0 %v314
    %v1553 = vpop.f32.mrf.mxu0
    %v1554 = vadd.f32 %v1525, %v1553
    %v1555 = vpop.f32.mrf.mxu0
    %v1556 = vadd.f32 %v1527, %v1555
    %1557 = vmatmul.bf16.gmra.mxu0 %v318
    %v1558 = vpop.f32.mrf.mxu0
    %v1559 = vadd.f32 %v1530, %v1558
    %v1560 = vpop.f32.mrf.mxu0
    %v1561 = vadd.f32 %v1532, %v1560
    %1562 = vdwg.mxu0
    %v1563 = vmax.f32 %v1196, 0.0
    %v1564 = vmax.f32 %v1312, 0.0
    %v1565 = vmax.f32 %v1428, 0.0
    %v1566 = vmax.f32 %v1544, 0.0
    %v1567 = vmax.f32 %v1198, 0.0
    %v1568 = vmax.f32 %v1314, 0.0
    %v1569 = vmax.f32 %v1430, 0.0
    %v1570 = vmax.f32 %v1546, 0.0
    %v1571 = vmax.f32 %v1201, 0.0
    %v1572 = vmax.f32 %v1317, 0.0
    %v1573 = vmax.f32 %v1433, 0.0
    %v1574 = vmax.f32 %v1549, 0.0
    %v1575 = vmax.f32 %v1203, 0.0
    %v1576 = vmax.f32 %v1319, 0.0
    %v1577 = vmax.f32 %v1435, 0.0
    %v1578 = vmax.f32 %v1551, 0.0
    %v1579 = vmax.f32 %v1206, 0.0
    %v1580 = vmax.f32 %v1322, 0.0
    %v1581 = vmax.f32 %v1438, 0.0
    %v1582 = vmax.f32 %v1554, 0.0
    %v1583 = vmax.f32 %v1208, 0.0
    %v1584 = vmax.f32 %v1324, 0.0
    %v1585 = vmax.f32 %v1440, 0.0
    %v1586 = vmax.f32 %v1556, 0.0
    %v1587 = vmax.f32 %v1211, 0.0
    %v1588 = vmax.f32 %v1327, 0.0
    %v1589 = vmax.f32 %v1443, 0.0
    %v1590 = vmax.f32 %v1559, 0.0
    %v1591 = vmax.f32 %v1213, 0.0
    %v1592 = vmax.f32 %v1329, 0.0
    %v1593 = vmax.f32 %v1445, 0.0
    %v1594 = vmax.f32 %v1561, 0.0
    %v1595 = vpack.c.bf16 %v1567, %v1563
    %v1596 = vpack.c.bf16 %v1568, %v1564
    %v1597 = vpack.c.bf16 %v1569, %v1565
    %v1598 = vpack.c.bf16 %v1570, %v1566
    %v1599 = vpack.c.bf16 %v1575, %v1571
    %v1600 = vpack.c.bf16 %v1576, %v1572
    %v1601 = vpack.c.bf16 %v1577, %v1573
    %v1602 = vpack.c.bf16 %v1578, %v1574
    %v1603 = vpack.c.bf16 %v1583, %v1579
    %v1604 = vpack.c.bf16 %v1584, %v1580
    %v1605 = vpack.c.bf16 %v1585, %v1581
    %v1606 = vpack.c.bf16 %v1586, %v1582
    %v1607 = vpack.c.bf16 %v1591, %v1587
    %v1608 = vpack.c.bf16 %v1592, %v1588
    %v1609 = vpack.c.bf16 %v1593, %v1589
    %v1610 = vpack.c.bf16 %v1594, %v1590
    %v1611 = vld [vmem:[#allocation2 + $0x10] sm:$0xf]
    %v1612 = vld [vmem:[#allocation2 + $0x24] sm:$0xf]
    %v1613 = vld [vmem:[#allocation2 + $0x38] sm:$0xf]
    %v1614 = vld [vmem:[#allocation2 + $0x4c] sm:$0xf]
    %v1615 = vld [vmem:[#allocation2 + $0x60] sm:$0xf]
    %v1616 = vld [vmem:[#allocation2 + $0x74] sm:$0xf]
    %v1617 = vld [vmem:[#allocation2 + $0x88] sm:$0xf]
    %v1618 = vld [vmem:[#allocation2 + $0x9c] sm:$0xf]
    %v1619 = vld [vmem:[#allocation2 + $0xb0] sm:$0xf]
    %v1620 = vld [vmem:[#allocation2 + $0xc4] sm:$0xf]
    %v1621 = vld [vmem:[#allocation2 + $0xd8] sm:$0xf]
    %v1622 = vld [vmem:[#allocation2 + $0xec] sm:$0xf]
    %v1623 = vld [vmem:[#allocation2 + $0x100] sm:$0xf]
    %v1624 = vld [vmem:[#allocation2 + $0x114] sm:$0xf]
    %v1625 = vld [vmem:[#allocation2 + $0x128] sm:$0xf]
    %v1626 = vld [vmem:[#allocation2 + $0x13c] sm:$0xf]
    %v1627 = vld [vmem:[#allocation2 + $0x150] sm:$0xf]
    %v1628 = vld [vmem:[#allocation2 + $0x164] sm:$0xf]
    %v1629 = vld [vmem:[#allocation2 + $0x178] sm:$0xf]
    %v1630 = vld [vmem:[#allocation2 + $0x18c] sm:$0xf]
    %v1631 = vld [vmem:[#allocation2 + $0x1a0] sm:$0xf]
    %v1632 = vld [vmem:[#allocation2 + $0x1b4] sm:$0xf]
    %v1633 = vld [vmem:[#allocation2 + $0x1c8] sm:$0xf]
    %v1634 = vld [vmem:[#allocation2 + $0x1dc] sm:$0xf]
    %v1635 = vld [vmem:[#allocation2 + $0x1f0] sm:$0xf]
    %v1636 = vld [vmem:[#allocation2 + $0x204] sm:$0xf]
    %v1637 = vld [vmem:[#allocation2 + $0x218] sm:$0xf]
    %v1638 = vld [vmem:[#allocation2 + $0x22c] sm:$0xf]
    %v1639 = vld [vmem:[#allocation2 + $0x240] sm:$0xf]
    %v1640 = vld [vmem:[#allocation2 + $0x254] sm:$0xf]
    %v1641 = vld [vmem:[#allocation2 + $0x268] sm:$0xf]
    %v1642 = vld [vmem:[#allocation2 + $0x27c] sm:$0xf]
    %v1643 = vld [vmem:[#allocation2 + $0x290] sm:$0xf]
    %v1644 = vld [vmem:[#allocation2 + $0x2a4] sm:$0xf]
    %v1645 = vld [vmem:[#allocation2 + $0x2b8] sm:$0xf]
    %v1646 = vld [vmem:[#allocation2 + $0x2cc] sm:$0xf]
    %v1647 = vld [vmem:[#allocation2 + $0x2e0] sm:$0xf]
    %v1648 = vld [vmem:[#allocation2 + $0x2f4] sm:$0xf]
    %v1649 = vld [vmem:[#allocation2 + $0x308] sm:$0xf]
    %v1650 = vld [vmem:[#allocation2 + $0x31c] sm:$0xf]
    %v1651 = vld [vmem:[#allocation2 + $0x330] sm:$0xf]
    %v1652 = vld [vmem:[#allocation2 + $0x344] sm:$0xf]
    %v1653 = vld [vmem:[#allocation2 + $0x358] sm:$0xf]
    %v1654 = vld [vmem:[#allocation2 + $0x36c] sm:$0xf]
    %v1655 = vld [vmem:[#allocation2 + $0x380] sm:$0xf]
    %v1656 = vld [vmem:[#allocation2 + $0x394] sm:$0xf]
    %v1657 = vld [vmem:[#allocation2 + $0x3a8] sm:$0xf]
    %v1658 = vld [vmem:[#allocation2 + $0x3bc] sm:$0xf]
    %v1659 = vld [vmem:[#allocation2 + $0x3d0] sm:$0xf]
    %v1660 = vld [vmem:[#allocation2 + $0x3e4] sm:$0xf]
    %v1661 = vld [vmem:[#allocation2 + $0x3f8] sm:$0xf]
    %v1662 = vld [vmem:[#allocation2 + $0x40c] sm:$0xf]
    %v1663 = vld [vmem:[#allocation2 + $0x420] sm:$0xf]
    %v1664 = vld [vmem:[#allocation2 + $0x434] sm:$0xf]
    %v1665 = vld [vmem:[#allocation2 + $0x448] sm:$0xf]
    %v1666 = vld [vmem:[#allocation2 + $0x45c] sm:$0xf]
    %v1667 = vld [vmem:[#allocation2 + $0x470] sm:$0xf]
    %v1668 = vld [vmem:[#allocation2 + $0x484] sm:$0xf]
    %v1669 = vld [vmem:[#allocation2 + $0x498] sm:$0xf]
    %v1670 = vld [vmem:[#allocation2 + $0x4ac] sm:$0xf]
    %v1671 = vld [vmem:[#allocation2 + $0x4c0] sm:$0xf]
    %v1672 = vld [vmem:[#allocation2 + $0x4d4] sm:$0xf]
    %v1673 = vld [vmem:[#allocation2 + $0x4e8] sm:$0xf]
    %v1674 = vld [vmem:[#allocation2 + $0x4fc] sm:$0xf]
    %v1675 = vperm.slane %v33, 2
    %v1740 = vunpack.c.l.b16 %v1611
    %v1741 = vunpack.c.l.b16 %v1612
    %v1742 = vunpack.c.l.b16 %v1613
    %v1743 = vunpack.c.l.b16 %v1614
    %v1744 = vunpack.c.l.b16 %v1615
    %v1745 = vunpack.c.l.b16 %v1616
    %v1746 = vunpack.c.l.b16 %v1617
    %v1747 = vunpack.c.l.b16 %v1618
    %v1748 = vunpack.c.l.b16 %v1619
    %v1749 = vunpack.c.l.b16 %v1620
    %v1750 = vunpack.c.l.b16 %v1621
    %v1751 = vunpack.c.l.b16 %v1622
    %v1752 = vunpack.c.l.b16 %v1623
    %v1753 = vunpack.c.l.b16 %v1624
    %v1754 = vunpack.c.l.b16 %v1625
    %v1755 = vunpack.c.l.b16 %v1626
    %v1756 = vunpack.c.l.b16 %v1627
    %v1757 = vunpack.c.l.b16 %v1628
    %v1758 = vunpack.c.l.b16 %v1629
    %v1759 = vunpack.c.l.b16 %v1630
    %v1760 = vunpack.c.l.b16 %v1631
    %v1761 = vunpack.c.l.b16 %v1632
    %v1762 = vunpack.c.l.b16 %v1633
    %v1763 = vunpack.c.l.b16 %v1634
    %v1764 = vunpack.c.l.b16 %v1635
    %v1765 = vunpack.c.l.b16 %v1636
    %v1766 = vunpack.c.l.b16 %v1637
    %v1767 = vunpack.c.l.b16 %v1638
    %v1768 = vunpack.c.l.b16 %v1639
    %v1769 = vunpack.c.l.b16 %v1640
    %v1770 = vunpack.c.l.b16 %v1641
    %v1771 = vunpack.c.l.b16 %v1642
    %v1772 = vunpack.c.l.b16 %v1643
    %v1773 = vunpack.c.l.b16 %v1644
    %v1774 = vunpack.c.l.b16 %v1645
    %v1775 = vunpack.c.l.b16 %v1646
    %v1776 = vunpack.c.l.b16 %v1647
    %v1777 = vunpack.c.l.b16 %v1648
    %v1778 = vunpack.c.l.b16 %v1649
    %v1779 = vunpack.c.l.b16 %v1650
    %v1780 = vunpack.c.l.b16 %v1651
    %v1781 = vunpack.c.l.b16 %v1652
    %v1782 = vunpack.c.l.b16 %v1653
    %v1783 = vunpack.c.l.b16 %v1654
    %v1784 = vunpack.c.l.b16 %v1655
    %v1785 = vunpack.c.l.b16 %v1656
    %v1786 = vunpack.c.l.b16 %v1657
    %v1787 = vunpack.c.l.b16 %v1658
    %v1788 = vunpack.c.l.b16 %v1659
    %v1789 = vunpack.c.l.b16 %v1660
    %v1790 = vunpack.c.l.b16 %v1661
    %v1791 = vunpack.c.l.b16 %v1662
    %v1792 = vunpack.c.l.b16 %v1663
    %v1793 = vunpack.c.l.b16 %v1664
    %v1794 = vunpack.c.l.b16 %v1665
    %v1795 = vunpack.c.l.b16 %v1666
    %v1796 = vunpack.c.l.b16 %v1667
    %v1797 = vunpack.c.l.b16 %v1668
    %v1798 = vunpack.c.l.b16 %v1669
    %v1799 = vunpack.c.l.b16 %v1670
    %v1800 = vunpack.c.l.b16 %v1671
    %v1801 = vunpack.c.l.b16 %v1672
    %v1802 = vunpack.c.l.b16 %v1673
    %v1803 = vunpack.c.l.b16 %v1674
    %v1804 = vpack.c.b16 %v1741, %v1740
    %v1805 = vpack.c.b16 %v1743, %v1742
    %v1806 = vpack.c.b16 %v1745, %v1744
    %v1807 = vpack.c.b16 %v1747, %v1746
    %v1808 = vpack.c.b16 %v1749, %v1748
    %v1809 = vpack.c.b16 %v1751, %v1750
    %v1810 = vpack.c.b16 %v1753, %v1752
    %v1811 = vpack.c.b16 %v1755, %v1754
    %v1812 = vpack.c.b16 %v1757, %v1756
    %v1813 = vpack.c.b16 %v1759, %v1758
    %v1814 = vpack.c.b16 %v1761, %v1760
    %v1815 = vpack.c.b16 %v1763, %v1762
    %v1816 = vpack.c.b16 %v1765, %v1764
    %v1817 = vpack.c.b16 %v1767, %v1766
    %v1818 = vpack.c.b16 %v1769, %v1768
    %v1819 = vpack.c.b16 %v1771, %v1770
    %v1820 = vpack.c.b16 %v1773, %v1772
    %v1821 = vpack.c.b16 %v1775, %v1774
    %v1822 = vpack.c.b16 %v1777, %v1776
    %v1823 = vpack.c.b16 %v1779, %v1778
    %v1824 = vpack.c.b16 %v1781, %v1780
    %v1825 = vpack.c.b16 %v1783, %v1782
    %v1826 = vpack.c.b16 %v1785, %v1784
    %v1827 = vpack.c.b16 %v1787, %v1786
    %v1828 = vpack.c.b16 %v1789, %v1788
    %v1829 = vpack.c.b16 %v1791, %v1790
    %v1830 = vpack.c.b16 %v1793, %v1792
    %v1831 = vpack.c.b16 %v1795, %v1794
    %v1832 = vpack.c.b16 %v1797, %v1796
    %v1833 = vpack.c.b16 %v1799, %v1798
    %v1834 = vpack.c.b16 %v1801, %v1800
    %v1835 = vpack.c.b16 %v1803, %v1802
    %1868 = vmatpush.bf16.msra.mxu0 %v1811
    %1869 = vmatpush.bf16.msra.mxu0 %v1810
    %1870 = vmatpush.bf16.msra.mxu0 %v1809
    %1871 = vmatpush.bf16.msra.mxu0 %v1808
    %1872 = vmatpush.bf16.msra.mxu0 %v1807
    %1873 = vmatpush.bf16.msra.mxu0 %v1806
    %1874 = vmatpush.bf16.msra.mxu0 %v1805
    %1875 = vmatpush.bf16.msra.mxu0 %v1804
    %1876 = vmatmul.bf16.gmra.mxu0 %v1595
    %v1877 = vpop.f32.mrf.mxu0
    %v1878 = vadd.f32 %v1675, %v1877
    %v1879 = vpop.f32.mrf.mxu0
    %v1880 = vadd.f32 %v1675, %v1879
    %1881 = vmatmul.bf16.gmra.mxu0 %v1599
    %v1882 = vpop.f32.mrf.mxu0
    %v1883 = vadd.f32 %v1675, %v1882
    %v1884 = vpop.f32.mrf.mxu0
    %v1885 = vadd.f32 %v1675, %v1884
    %1886 = vmatmul.bf16.gmra.mxu0 %v1603
    %v1887 = vpop.f32.mrf.mxu0
    %v1888 = vadd.f32 %v1675, %v1887
    %v1889 = vpop.f32.mrf.mxu0
    %v1890 = vadd.f32 %v1675, %v1889
    %1891 = vmatmul.bf16.gmra.mxu0 %v1607
    %v1892 = vpop.f32.mrf.mxu0
    %v1893 = vadd.f32 %v1675, %v1892
    %v1894 = vpop.f32.mrf.mxu0
    %v1895 = vadd.f32 %v1675, %v1894
    %1896 = vdwg.mxu0
    %1897 = vmatpush.bf16.msra.mxu0 %v1819
    %1898 = vmatpush.bf16.msra.mxu0 %v1818
    %1899 = vmatpush.bf16.msra.mxu0 %v1817
    %1900 = vmatpush.bf16.msra.mxu0 %v1816
    %1901 = vmatpush.bf16.msra.mxu0 %v1815
    %1902 = vmatpush.bf16.msra.mxu0 %v1814
    %1903 = vmatpush.bf16.msra.mxu0 %v1813
    %1904 = vmatpush.bf16.msra.mxu0 %v1812
    %1905 = vmatmul.bf16.gmra.mxu0 %v1596
    %v1906 = vpop.f32.mrf.mxu0
    %v1907 = vadd.f32 %v1878, %v1906
    %v1908 = vpop.f32.mrf.mxu0
    %v1909 = vadd.f32 %v1880, %v1908
    %1910 = vmatmul.bf16.gmra.mxu0 %v1600
    %v1911 = vpop.f32.mrf.mxu0
    %v1912 = vadd.f32 %v1883, %v1911
    %v1913 = vpop.f32.mrf.mxu0
    %v1914 = vadd.f32 %v1885, %v1913
    %1915 = vmatmul.bf16.gmra.mxu0 %v1604
    %v1916 = vpop.f32.mrf.mxu0
    %v1917 = vadd.f32 %v1888, %v1916
    %v1918 = vpop.f32.mrf.mxu0
    %v1919 = vadd.f32 %v1890, %v1918
    %1920 = vmatmul.bf16.gmra.mxu0 %v1608
    %v1921 = vpop.f32.mrf.mxu0
    %v1922 = vadd.f32 %v1893, %v1921
    %v1923 = vpop.f32.mrf.mxu0
    %v1924 = vadd.f32 %v1895, %v1923
    %1925 = vdwg.mxu0
    %1926 = vmatpush.bf16.msra.mxu0 %v1827
    %1927 = vmatpush.bf16.msra.mxu0 %v1826
    %1928 = vmatpush.bf16.msra.mxu0 %v1825
    %1929 = vmatpush.bf16.msra.mxu0 %v1824
    %1930 = vmatpush.bf16.msra.mxu0 %v1823
    %1931 = vmatpush.bf16.msra.mxu0 %v1822
    %1932 = vmatpush.bf16.msra.mxu0 %v1821
    %1933 = vmatpush.bf16.msra.mxu0 %v1820
    %1934 = vmatmul.bf16.gmra.mxu0 %v1597
    %v1935 = vpop.f32.mrf.mxu0
    %v1936 = vadd.f32 %v1907, %v1935
    %v1937 = vpop.f32.mrf.mxu0
    %v1938 = vadd.f32 %v1909, %v1937
    %1939 = vmatmul.bf16.gmra.mxu0 %v1601
    %v1940 = vpop.f32.mrf.mxu0
    %v1941 = vadd.f32 %v1912, %v1940
    %v1942 = vpop.f32.mrf.mxu0
    %v1943 = vadd.f32 %v1914, %v1942
    %1944 = vmatmul.bf16.gmra.mxu0 %v1605
    %v1945 = vpop.f32.mrf.mxu0
    %v1946 = vadd.f32 %v1917, %v1945
    %v1947 = vpop.f32.mrf.mxu0
    %v1948 = vadd.f32 %v1919, %v1947
    %1949 = vmatmul.bf16.gmra.mxu0 %v1609
    %v1950 = vpop.f32.mrf.mxu0
    %v1951 = vadd.f32 %v1922, %v1950
    %v1952 = vpop.f32.mrf.mxu0
    %v1953 = vadd.f32 %v1924, %v1952
    %1954 = vdwg.mxu0
    %1955 = vmatpush.bf16.msra.mxu0 %v1835
    %1956 = vmatpush.bf16.msra.mxu0 %v1834
    %1957 = vmatpush.bf16.msra.mxu0 %v1833
    %1958 = vmatpush.bf16.msra.mxu0 %v1832
    %1959 = vmatpush.bf16.msra.mxu0 %v1831
    %1960 = vmatpush.bf16.msra.mxu0 %v1830
    %1961 = vmatpush.bf16.msra.mxu0 %v1829
    %1962 = vmatpush.bf16.msra.mxu0 %v1828
    %1963 = vmatmul.bf16.gmra.mxu0 %v1598
    %v1964 = vpop.f32.mrf.mxu0
    %v1965 = vadd.f32 %v1936, %v1964
    %v1966 = vpop.f32.mrf.mxu0
    %v1967 = vadd.f32 %v1938, %v1966
    %1968 = vmatmul.bf16.gmra.mxu0 %v1602
    %v1969 = vpop.f32.mrf.mxu0
    %v1970 = vadd.f32 %v1941, %v1969
    %v1971 = vpop.f32.mrf.mxu0
    %v1972 = vadd.f32 %v1943, %v1971
    %1973 = vmatmul.bf16.gmra.mxu0 %v1606
    %v1974 = vpop.f32.mrf.mxu0
    %v1975 = vadd.f32 %v1946, %v1974
    %v1976 = vpop.f32.mrf.mxu0
    %v1977 = vadd.f32 %v1948, %v1976
    %1978 = vmatmul.bf16.gmra.mxu0 %v1610
    %v1979 = vpop.f32.mrf.mxu0
    %v1980 = vadd.f32 %v1951, %v1979
    %v1981 = vpop.f32.mrf.mxu0
    %v1982 = vadd.f32 %v1953, %v1981
    %1983 = vdwg.mxu0
    %1984 = vst [vmem:[%s4] sm:$0xff] %v1965
    %1985 = vst [vmem:[%s4 + $0x8] sm:$0xff] %v1967
    %1986 = vst [vmem:[%s4 + $0x10] sm:$0xff] %v1970
    %1987 = vst [vmem:[%s4 + $0x18] sm:$0xff] %v1972
    %1988 = vst [vmem:[%s4 + $0x20] sm:$0xff] %v1975
    %1989 = vst [vmem:[%s4 + $0x28] sm:$0xff] %v1977
    %1990 = vst [vmem:[%s4 + $0x30] sm:$0xff] %v1980
    %1991 = vst [vmem:[%s4 + $0x38] sm:$0xff] %v1982
    // Predicated region
    $region22: #{critic_forward.1} parent=1 // pred_check
      _
    $region23: #{critic_forward.1} parent=1 // pred_check_branch
      %1993 = sbr.rel (0) target = $region25
    $region24: #{critic_forward.1} parent=1 // pred_region
      _
    $region25: #{critic_forward.1} parent=1 // pred_fallthru
      _
    // Predicated region
    $region26: #{critic_forward.1} parent=1 // pred_check
      _
    $region27: #{critic_forward.1} parent=1 // pred_check_branch
      %1995 = sbr.rel (0) target = $region29
    $region28: #{critic_forward.1} parent=1 // pred_region
      _
    $region29: #{critic_forward.1} parent=1 // pred_fallthru
      _
    %1996 = vsyncpa [#allocation3], 1

</llo_original>
